<compile_context>
chip_gen: v7x
topology: tpu7x:2x2x1
jax: 0.10.0
libtpu: 0.0.40
codegen_flags: <defaults>
</compile_context>

<pallas_src>
import math
import functools

import jax
import jax.numpy as jnp
from jax.experimental import pallas as pl
from jax.experimental.pallas import tpu as pltpu

EPS = 1e-5            # layer_norm_eps
MAX_TILE = 1024       # large row tiles amortize the ~0.35us per-grid-step overhead
SCORE_LANES = 128     # lane-dense per-edge score output (heads live in the first lanes)

_CPARAMS = pltpu.CompilerParams(
    dimension_semantics=("parallel",),
    vmem_limit_bytes=32 * 1024 * 1024,   # safe on v7x (64 MiB physical) and v5e/v6e
)


# ---------------------------------------------------------------------------
# Row tiling helpers: big padded tiles, no forced multi-block split for small rows
# ---------------------------------------------------------------------------

def _round_up(x, m):
    return -(-x // m) * m


def _row_tiling(rows, max_tile=MAX_TILE):
    """Return (padded_rows, tile, num_blocks). Tiles are multiples of 16 (bf16-safe)."""
    if rows >= max_tile:
        tile = max_tile
    else:
        tile = max(_round_up(rows, 16), 16)
    padded = _round_up(rows, tile)
    return padded, tile, padded // tile


def _pad_rows(x, padded_rows):
    rows = x.shape[0]
    if padded_rows == rows:
        return x
    return jnp.pad(x, ((0, padded_rows - rows), (0, 0)))


def _ln_f32(r, g, b, eps):
    """Row LayerNorm in fp32 (r already fp32; g/b fp32 row vectors)."""
    mu = jnp.mean(r, axis=-1, keepdims=True)
    var = jnp.mean((r - mu) ** 2, axis=-1, keepdims=True)
    return (r - mu) * jax.lax.rsqrt(var + eps) * g + b


# ---------------------------------------------------------------------------
# Pallas kernels
# ---------------------------------------------------------------------------

def _linear_kernel(x_ref, w_ref, b_ref, o_ref, *, relu):
    x = x_ref[...].astype(jnp.bfloat16)
    w = w_ref[...].astype(jnp.bfloat16)
    y = jnp.dot(x, w, preferred_element_type=jnp.float32)
    y = y + b_ref[...].astype(jnp.float32)
    if relu:
        y = jnp.maximum(y, 0.0)
    o_ref[...] = y.astype(o_ref.dtype)


def pallas_linear(x, w, b, relu=False, out_dtype=None):
    rows, k = x.shape
    n = w.shape[1]
    out_dtype = out_dtype or x.dtype
    padded, tile, nblk = _row_tiling(rows)
    xp = _pad_rows(x, padded)
    out = pl.pallas_call(
        functools.partial(_linear_kernel, relu=relu),
        out_shape=jax.ShapeDtypeStruct((padded, n), out_dtype),
        grid=(nblk,),
        in_specs=[
            pl.BlockSpec((tile, k), lambda i: (i, 0)),
            pl.BlockSpec((k, n), lambda i: (0, 0)),
            pl.BlockSpec((1, n), lambda i: (0, 0)),
        ],
        out_specs=pl.BlockSpec((tile, n), lambda i: (i, 0)),
        compiler_params=_CPARAMS,
    )(xp, w, b.reshape(1, n))
    return out[:rows]


def _edge_msg_kernel(qd_ref, ks_ref, vs_ref, ea_ref, we_ref, be_ref,
                     sel_ref, weo_ref, beo_ref,
                     score_ref, msg_ref, ne_ref, *, scale):
    # fused edge-feature projection: Ep = edge_attr @ We + be (never hits HBM)
    ep = jnp.dot(ea_ref[...].astype(jnp.bfloat16), we_ref[...].astype(jnp.bfloat16),
                 preferred_element_type=jnp.float32) + be_ref[...].astype(jnp.float32)

    qd = qd_ref[...].astype(jnp.float32)
    ke = ks_ref[...].astype(jnp.float32) + ep
    prod = (qd * ke).astype(jnp.bfloat16)                 # (tile, heads*df) bf16

    # message: V_src + E   (bf16 writeback; alpha-weighted & segment-summed in fp32 in XLA)
    msg_ref[...] = (vs_ref[...].astype(jnp.float32) + ep).astype(msg_ref.dtype)

    # per-head scores via one MXU matmul against a 0/1 selector (lane-dense 128 wide),
    # replacing the former per-head XLU-reduction loop.
    score = jnp.dot(prod, sel_ref[...].astype(jnp.bfloat16),
                    preferred_element_type=jnp.float32) * scale
    score_ref[...] = score.astype(score_ref.dtype)

    # edge-output projection fused here: prod never round-trips through HBM.
    ne = jnp.dot(prod, weo_ref[...].astype(jnp.bfloat16),
                 preferred_element_type=jnp.float32) + beo_ref[...].astype(jnp.float32)
    ne_ref[...] = ne.astype(ne_ref.dtype)


def pallas_edge_messages(qd, ks, vs, edge_attr, we, be, sel, w_eout, b_eout, heads, df):
    m, dxh = qd.shape
    de = edge_attr.shape[1]
    padded, tile, nblk = _row_tiling(m)
    qd, ks, vs, ea = (_pad_rows(a, padded) for a in (qd, ks, vs, edge_attr))
    scores, msg, new_e = pl.pallas_call(
        functools.partial(_edge_msg_kernel, scale=1.0 / math.sqrt(df)),
        out_shape=(
            jax.ShapeDtypeStruct((padded, SCORE_LANES), jnp.bfloat16),
            jax.ShapeDtypeStruct((padded, dxh), jnp.bfloat16),
            jax.ShapeDtypeStruct((padded, de), jnp.float32),
        ),
        grid=(nblk,),
        in_specs=[
            pl.BlockSpec((tile, dxh), lambda i: (i, 0)),
            pl.BlockSpec((tile, dxh), lambda i: (i, 0)),
            pl.BlockSpec((tile, dxh), lambda i: (i, 0)),
            pl.BlockSpec((tile, de), lambda i: (i, 0)),
            pl.BlockSpec((de, dxh), lambda i: (0, 0)),
            pl.BlockSpec((1, dxh), lambda i: (0, 0)),
            pl.BlockSpec((dxh, SCORE_LANES), lambda i: (0, 0)),
            pl.BlockSpec((dxh, de), lambda i: (0, 0)),
            pl.BlockSpec((1, de), lambda i: (0, 0)),
        ],
        out_specs=(
            pl.BlockSpec((tile, SCORE_LANES), lambda i: (i, 0)),
            pl.BlockSpec((tile, dxh), lambda i: (i, 0)),
            pl.BlockSpec((tile, de), lambda i: (i, 0)),
        ),
        compiler_params=_CPARAMS,
    )(qd, ks, vs, ea, we, be.reshape(1, dxh), sel, w_eout, b_eout.reshape(1, de))
    return (scores[:m, :heads].astype(jnp.float32),
            msg[:m].astype(jnp.float32),
            new_e[:m])


def _x_epilogue_kernel(agg_ref, x_ref, wxo_ref, bxo_ref, g1_ref, b1_ref,
                       w1_ref, fb1_ref, w2_ref, fb2_ref, g2_ref, b2_ref,
                       o_ref, *, eps):
    # new_x = agg @ W_xout + b_xout  (attention output projection, fused in)
    new_x = jnp.dot(agg_ref[...].astype(jnp.bfloat16), wxo_ref[...].astype(jnp.bfloat16),
                    preferred_element_type=jnp.float32) + bxo_ref[...].astype(jnp.float32)
    # residual + LN1
    h = _ln_f32(x_ref[...].astype(jnp.float32) + new_x,
                g1_ref[...].astype(jnp.float32), b1_ref[...].astype(jnp.float32), eps)
    # FFN: Linear -> ReLU -> Linear
    hid = jnp.dot(h.astype(jnp.bfloat16), w1_ref[...].astype(jnp.bfloat16),
                  preferred_element_type=jnp.float32) + fb1_ref[...].astype(jnp.float32)
    hid = jnp.maximum(hid, 0.0)
    ff = jnp.dot(hid.astype(jnp.bfloat16), w2_ref[...].astype(jnp.bfloat16),
                 preferred_element_type=jnp.float32) + fb2_ref[...].astype(jnp.float32)
    # residual + LN2
    out = _ln_f32(h + ff, g2_ref[...].astype(jnp.float32), b2_ref[...].astype(jnp.float32), eps)
    o_ref[...] = out.astype(o_ref.dtype)


def pallas_x_epilogue(agg, x, wxo, bxo, g1, b1, w1, fb1, w2, fb2, g2, b2):
    rows, dx = x.shape
    dff = w1.shape[1]
    padded, tile, nblk = _row_tiling(rows)
    aggp, xp = _pad_rows(agg, padded), _pad_rows(x, padded)
    out = pl.pallas_call(
        functools.partial(_x_epilogue_kernel, eps=EPS),
        out_shape=jax.ShapeDtypeStruct((padded, dx), x.dtype),
        grid=(nblk,),
        in_specs=[
            pl.BlockSpec((tile, dx), lambda i: (i, 0)),
            pl.BlockSpec((tile, dx), lambda i: (i, 0)),
            pl.BlockSpec((dx, dx), lambda i: (0, 0)),
            pl.BlockSpec((1, dx), lambda i: (0, 0)),
            pl.BlockSpec((1, dx), lambda i: (0, 0)),
            pl.BlockSpec((1, dx), lambda i: (0, 0)),
            pl.BlockSpec((dx, dff), lambda i: (0, 0)),
            pl.BlockSpec((1, dff), lambda i: (0, 0)),
            pl.BlockSpec((dff, dx), lambda i: (0, 0)),
            pl.BlockSpec((1, dx), lambda i: (0, 0)),
            pl.BlockSpec((1, dx), lambda i: (0, 0)),
            pl.BlockSpec((1, dx), lambda i: (0, 0)),
        ],
        out_specs=pl.BlockSpec((tile, dx), lambda i: (i, 0)),
        compiler_params=_CPARAMS,
    )(aggp, xp, wxo, bxo.reshape(1, dx), g1.reshape(1, dx), b1.reshape(1, dx),
      w1, fb1.reshape(1, dff), w2, fb2.reshape(1, dx),
      g2.reshape(1, dx), b2.reshape(1, dx))
    return out[:rows]


def _e_epilogue_kernel(ne_ref, e_ref, g1_ref, b1_ref, w1_ref, fb1_ref,
                       w2_ref, fb2_ref, g2_ref, b2_ref, o_ref, *, eps):
    h = _ln_f32(e_ref[...].astype(jnp.float32) + ne_ref[...].astype(jnp.float32),
                g1_ref[...].astype(jnp.float32), b1_ref[...].astype(jnp.float32), eps)
    hid = jnp.dot(h.astype(jnp.bfloat16), w1_ref[...].astype(jnp.bfloat16),
                  preferred_element_type=jnp.float32) + fb1_ref[...].astype(jnp.float32)
    hid = jnp.maximum(hid, 0.0)
    ff = jnp.dot(hid.astype(jnp.bfloat16), w2_ref[...].astype(jnp.bfloat16),
                 preferred_element_type=jnp.float32) + fb2_ref[...].astype(jnp.float32)
    out = _ln_f32(h + ff, g2_ref[...].astype(jnp.float32), b2_ref[...].astype(jnp.float32), eps)
    o_ref[...] = out.astype(o_ref.dtype)


def pallas_e_epilogue(new_e, e, g1, b1, w1, fb1, w2, fb2, g2, b2):
    rows, de = e.shape
    dff = w1.shape[1]
    padded, tile, nblk = _row_tiling(rows)
    nep, ep = _pad_rows(new_e, padded), _pad_rows(e, padded)
    out = pl.pallas_call(
        functools.partial(_e_epilogue_kernel, eps=EPS),
        out_shape=jax.ShapeDtypeStruct((padded, de), e.dtype),
        grid=(nblk,),
        in_specs=[
            pl.BlockSpec((tile, de), lambda i: (i, 0)),
            pl.BlockSpec((tile, de), lambda i: (i, 0)),
            pl.BlockSpec((1, de), lambda i: (0, 0)),
            pl.BlockSpec((1, de), lambda i: (0, 0)),
            pl.BlockSpec((de, dff), lambda i: (0, 0)),
            pl.BlockSpec((1, dff), lambda i: (0, 0)),
            pl.BlockSpec((dff, de), lambda i: (0, 0)),
            pl.BlockSpec((1, de), lambda i: (0, 0)),
            pl.BlockSpec((1, de), lambda i: (0, 0)),
            pl.BlockSpec((1, de), lambda i: (0, 0)),
        ],
        out_specs=pl.BlockSpec((tile, de), lambda i: (i, 0)),
        compiler_params=_CPARAMS,
    )(nep, ep, g1.reshape(1, de), b1.reshape(1, de),
      w1, fb1.reshape(1, dff), w2, fb2.reshape(1, de),
      g2.reshape(1, de), b2.reshape(1, de))
    return out[:rows]


# ---------------------------------------------------------------------------
# Plain-XLA helpers for the tiny global-feature (y) path
# ---------------------------------------------------------------------------

def _dense(x, w, b):
    return jnp.dot(x, w) + b


def _layernorm(x, g, b, eps=EPS):
    mu = jnp.mean(x, axis=-1, keepdims=True)
    var = jnp.mean((x - mu) ** 2, axis=-1, keepdims=True)
    return (x - mu) * jax.lax.rsqrt(var + eps) * g + b


# ---------------------------------------------------------------------------
# TransformerConv (graph self-attention updating X, E, y) — returns pre-projection
# node aggregate `agg` so its output projection fuses into the X epilogue kernel.
# ---------------------------------------------------------------------------

def transformer_conv(p, X, edge_index, edge_attr, y, batch, *, heads, last_layer):
    N, dx = X.shape
    M = edge_attr.shape[0]
    B, dy = y.shape
    df = dx // heads
    src, dst = edge_index[0], edge_index[1]

    # fused Q|K|V projection: lane-dense 128-wide output (zero-padded cols), bf16 out.
    qkv_w, qkv_b = p["Wqkv"], p["bqkv"]
    n_out = qkv_w.shape[1]
    n_pad = _round_up(n_out, 128)
    if n_pad != n_out:
        qkv_w = jnp.pad(qkv_w, ((0, 0), (0, n_pad - n_out)))
        qkv_b = jnp.pad(qkv_b, ((0, n_pad - n_out),))
    QKV = pallas_linear(X, qkv_w, qkv_b, out_dtype=jnp.bfloat16)
    Q, K, V = QKV[:, :dx], QKV[:, dx:2 * dx], QKV[:, 2 * dx:3 * dx]

    # 0/1 head selector (column k belongs to head k // df); rides the MXU in-kernel.
    sel = (jnp.arange(dx)[:, None] // df
           == jnp.arange(SCORE_LANES)[None, :]).astype(jnp.bfloat16)

    # TODO(synk): gathers stay in XLA (data-dependent; in-kernel SMEM-prefetch gather
    #             is a further optimization for M >> N workloads).
    qd, ks, vs = Q[dst], K[src], V[src]
    scores, msg, new_e = pallas_edge_messages(
        qd, ks, vs, edge_attr, p["We"], p["be"], sel, p["W_eout"], p["b_eout"], heads, df)

    # segment softmax of per-head scores over incoming edges of each target node
    smax = jax.ops.segment_max(scores, dst, num_segments=N)
    smax = jnp.where(jnp.isfinite(smax), smax, 0.0)
    ex = jnp.exp(scores - smax[dst])
    denom = jax.ops.segment_sum(ex, dst, num_segments=N)
    alpha = ex / jnp.maximum(denom[dst], 1e-16)            # (M, heads)

    weighted = (msg.reshape(M, heads, df) * alpha[:, :, None]).reshape(M, dx)
    agg = jax.ops.segment_sum(weighted, dst, num_segments=N)   # (N, dx) pre-projection

    # global feature update (B is tiny -> plain XLA, no pallas launch overhead)
    ones_n = jnp.ones((N, 1), X.dtype)
    n_per = jax.ops.segment_sum(ones_n, batch, num_segments=B)
    x_pool = jax.ops.segment_sum(X, batch, num_segments=B) / jnp.maximum(n_per, 1.0)
    e_batch = batch[src]
    ones_m = jnp.ones((M, 1), X.dtype)
    m_per = jax.ops.segment_sum(ones_m, e_batch, num_segments=B)
    e_pool = jax.ops.segment_sum(edge_attr, e_batch, num_segments=B) / jnp.maximum(m_per, 1.0)

    new_y = (_dense(y, p["W_yy"], p["b_yy"])
             + _dense(x_pool, p["W_xy"], p["b_xy"])
             + _dense(e_pool, p["W_ey"], p["b_ey"]))
    if last_layer:
        new_y = _dense(jax.nn.relu(_dense(new_y, p["W_yo1"], p["b_yo1"])),
                       p["W_yo2"], p["b_yo2"])
    return agg, new_e, new_y


# ---------------------------------------------------------------------------
# XEyTransformerLayer.forward
# ---------------------------------------------------------------------------

def xey_transformer_layer(params, X, edge_index, edge_attr, y, batch, *,
                          n_head, last_layer=True):
    p = params
    agg, new_e, new_y = transformer_conv(
        p["attn"], X, edge_index, edge_attr, y, batch,
        heads=n_head, last_layer=last_layer)

    # dropoutX*/dropoutE*/dropout_y* are identity in eval mode.
    # X path: W_xout + residual + LN1 + FFN + residual + LN2, one fused kernel.
    Xo = pallas_x_epilogue(agg, X,
                           p["attn"]["W_xout"], p["attn"]["b_xout"],
                           p["normX1_g"], p["normX1_b"],
                           p["WX1"], p["bX1"], p["WX2"], p["bX2"],
                           p["normX2_g"], p["normX2_b"])
    # E path: residual + LN1 + FFN + residual + LN2, one fused kernel.
    Eo = pallas_e_epilogue(new_e, edge_attr,
                           p["normE1_g"], p["normE1_b"],
                           p["WE1"], p["bE1"], p["WE2"], p["bE2"],
                           p["normE2_g"], p["normE2_b"])
    # y path: tiny (B rows), plain XLA.
    if last_layer:
        yo = _layernorm(y + new_y, p["norm_y1_g"], p["norm_y1_b"])
        ff_y = _dense(jax.nn.relu(_dense(yo, p["Wy1"], p["by1"])), p["Wy2"], p["by2"])
        yo = _layernorm(yo + ff_y, p["norm_y2_g"], p["norm_y2_b"])
    else:
        yo = new_y
    return Xo, Eo, yo


# ---------------------------------------------------------------------------
# Deterministic parameter init
# ---------------------------------------------------------------------------

def init_params(key, dx, de, dy, n_head, dim_ffX, dim_ffE, dim_ffy, last_layer=True):
    keys = iter(jax.random.split(key, 32))

    def lin(fan_in, fan_out):
        w = jax.random.normal(next(keys), (fan_in, fan_out), jnp.float32) / math.sqrt(fan_in)
        b = jnp.zeros((fan_out,), jnp.float32)
        return w, b

    attn = {}
    Wq, bq = lin(dx, dx)
    Wk, bk = lin(dx, dx)
    Wv, bv = lin(dx, dx)
    attn["Wqkv"] = jnp.concatenate([Wq, Wk, Wv], axis=1)   # fused Q|K|V projection
    attn["bqkv"] = jnp.concatenate([bq, bk, bv], axis=0)
    attn["We"], attn["be"] = lin(de, dx)
    attn["W_xout"], attn["b_xout"] = lin(dx, dx)
    attn["W_eout"], attn["b_eout"] = lin(dx, de)
    attn["W_yy"], attn["b_yy"] = lin(dy, dy)
    attn["W_xy"], attn["b_xy"] = lin(dx, dy)
    attn["W_ey"], attn["b_ey"] = lin(de, dy)
    if last_layer:
        attn["W_yo1"], attn["b_yo1"] = lin(dy, dy)
        attn["W_yo2"], attn["b_yo2"] = lin(dy, dy)

    p = {"attn": attn}
    p["WX1"], p["bX1"] = lin(dx, dim_ffX)
    p["WX2"], p["bX2"] = lin(dim_ffX, dx)
    p["WE1"], p["bE1"] = lin(de, dim_ffE)
    p["WE2"], p["bE2"] = lin(dim_ffE, de)
    if last_layer:
        p["Wy1"], p["by1"] = lin(dy, dim_ffy)
        p["Wy2"], p["by2"] = lin(dim_ffy, dy)

    for name, d in (("normX1", dx), ("normX2", dx), ("normE1", de), ("normE2", de),
                    ("norm_y1", dy), ("norm_y2", dy)):
        p[name + "_g"] = jnp.ones((d,), jnp.float32)
        p[name + "_b"] = jnp.zeros((d,), jnp.float32)
    return p


# ---------------------------------------------------------------------------
if __name__ == "__main__":
    key = jax.random.PRNGKey(0)
    kx, ke, ky, ks0, kd0, ks1, kd1, kp = jax.random.split(key, 8)

    N, M, B = 16, 32, 2
    dx, de, dy, n_head = 32, 16, 16, 4
    dim_ffX, dim_ffE, dim_ffy = 64, 32, 64

    # two graphs of 8 nodes each; edges stay within their graph
    batch = jnp.array([0] * 8 + [1] * 8, jnp.int32)
    src0 = jax.random.randint(ks0, (M // 2,), 0, 8)
    dst0 = (src0 + 1 + jax.random.randint(kd0, (M // 2,), 0, 7)) % 8
    src1 = jax.random.randint(ks1, (M // 2,), 0, 8) + 8
    dst1 = ((src1 - 8 + 1 + jax.random.randint(kd1, (M // 2,), 0, 7)) % 8) + 8
    src = jnp.concatenate([src0, src1]).astype(jnp.int32)
    dst = jnp.concatenate([dst0, dst1]).astype(jnp.int32)
    edge_index = jnp.stack([src, dst], axis=0)          # [2, M]

    X = jax.random.normal(kx, (N, dx), jnp.float32)
    edge_attr = jax.random.normal(ke, (M, de), jnp.float32)
    y = jax.random.normal(ky, (B, dy), jnp.float32)

    params = init_params(kp, dx, de, dy, n_head, dim_ffX, dim_ffE, dim_ffy,
                         last_layer=True)

    layer = jax.jit(functools.partial(xey_transformer_layer,
                                      n_head=n_head, last_layer=True))
    Xo, Eo, yo = layer(params, X, edge_index, edge_attr, y, batch)
    jax.block_until_ready((Xo, Eo, yo))
    assert Xo.shape == (N, dx) and Eo.shape == (M, de) and yo.shape == (B, dy)
    assert bool(jnp.all(jnp.isfinite(Xo))) and bool(jnp.all(jnp.isfinite(Eo)))
    assert bool(jnp.all(jnp.isfinite(yo)))
    print("KERNEL_OK")
</pallas_src>

<mosaic_0001>
module attributes {stable_mosaic.version = 11 : i64} {
  func.func private @main(%arg0: i32) attributes {dimension_semantics = [#tpu.dimension_semantics<core_parallel>], iteration_bounds = array<i64: 2>, tpu.core_type = #tpu.core_type<sc_scalar_subcore>, window_params = []} {
    return
  }
}

module attributes {stable_mosaic.version = 11 : i64} {
  func.func private @main(%arg0: i32) attributes {dimension_semantics = [#tpu.dimension_semantics<core_parallel>], iteration_bounds = array<i64: 2>, tpu.core_type = #tpu.core_type<sc_scalar_subcore>, window_params = []} {
    return
  }
}

module attributes {stable_mosaic.version = 11 : i64} {
  func.func @_linear_kernel(%arg0: i32, %arg1: memref<16x32xf32, #tpu.memory_space<vmem>>, %arg2: memref<32x128xf32, #tpu.memory_space<vmem>>, %arg3: memref<1x128xf32, #tpu.memory_space<vmem>>, %arg4: memref<16x128xbf16, #tpu.memory_space<vmem>>) attributes {dimension_semantics = [#tpu.dimension_semantics<parallel>], iteration_bounds = array<i64: 1>, scalar_prefetch = 0 : i64, scratch_operands = 0 : i64, tpu.core_type = #tpu.core_type<tc>, window_params = [{transform_indices = @transform_0, window_bounds = array<i64: 16, 32>}, {pipeline_mode = #tpu.pipeline_mode<synchronous>, transform_indices = @transform_1, window_bounds = array<i64: 32, 128>}, {pipeline_mode = #tpu.pipeline_mode<synchronous>, transform_indices = @transform_2, window_bounds = array<i64: 1, 128>}, {transform_indices = @transform_3, window_bounds = array<i64: 16, 128>}]} {
    %c0 = arith.constant 0 : index
    %c0_0 = arith.constant 0 : index
    %0 = vector.load %arg1[%c0, %c0_0] : memref<16x32xf32, #tpu.memory_space<vmem>>, vector<16x32xf32>
    %1 = arith.truncf %0 : vector<16x32xf32> to vector<16x32xbf16>
    %c0_1 = arith.constant 0 : index
    %c0_2 = arith.constant 0 : index
    %2 = vector.load %arg2[%c0_1, %c0_2] : memref<32x128xf32, #tpu.memory_space<vmem>>, vector<32x128xf32>
    %3 = arith.truncf %2 : vector<32x128xf32> to vector<32x128xbf16>
    %cst = arith.constant dense<0.000000e+00> : vector<16x128xf32>
    %4 = tpu.matmul %1, %3, %cst {dimension_numbers = #tpu.dot_dimension_numbers<[1], [0], [0], [1], [0, 0, 1, 1], [], []>} : vector<16x32xbf16>, vector<32x128xbf16>, vector<16x128xf32> -> vector<16x128xf32>
    %c0_3 = arith.constant 0 : index
    %c0_4 = arith.constant 0 : index
    %5 = vector.load %arg3[%c0_3, %c0_4] : memref<1x128xf32, #tpu.memory_space<vmem>>, vector<1x128xf32>
    %6 = vector.broadcast %5 : vector<1x128xf32> to vector<16x128xf32>
    %7 = arith.addf %4, %6 : vector<16x128xf32>
    %8 = arith.truncf %7 : vector<16x128xf32> to vector<16x128xbf16>
    %c0_5 = arith.constant 0 : index
    %c0_6 = arith.constant 0 : index
    %9 = vector.load %arg4[%c0_5, %c0_6] : memref<16x128xbf16, #tpu.memory_space<vmem>>, vector<16x128xbf16>
    tpu.vector_store %arg4[%c0_5, %c0_6], %8 {strides = array<i32>} : memref<16x128xbf16, #tpu.memory_space<vmem>>, vector<16x128xbf16>,
    return
  }
  func.func @transform_0(%arg0: i32) -> (i32, i32) {
    %c0_i32 = arith.constant 0 : i32
    %c0_i32_0 = arith.constant 0 : i32
    return %arg0, %c0_i32 : i32, i32
  }
  func.func @transform_1(%arg0: i32) -> (i32, i32) {
    %c0_i32 = arith.constant 0 : i32
    %c0_i32_0 = arith.constant 0 : i32
    %c0_i32_1 = arith.constant 0 : i32
    return %c0_i32, %c0_i32_0 : i32, i32
  }
  func.func @transform_2(%arg0: i32) -> (i32, i32) {
    %c0_i32 = arith.constant 0 : i32
    %c0_i32_0 = arith.constant 0 : i32
    %c0_i32_1 = arith.constant 0 : i32
    return %c0_i32, %c0_i32_0 : i32, i32
  }
  func.func @transform_3(%arg0: i32) -> (i32, i32) {
    %c0_i32 = arith.constant 0 : i32
    %c0_i32_0 = arith.constant 0 : i32
    return %arg0, %c0_i32 : i32, i32
  }
}

module attributes {stable_mosaic.version = 11 : i64} {
  func.func @_edge_msg_kernel(%arg0: i32, %arg1: memref<32x32xbf16, #tpu.memory_space<vmem>>, %arg2: memref<32x32xbf16, #tpu.memory_space<vmem>>, %arg3: memref<32x32xbf16, #tpu.memory_space<vmem>>, %arg4: memref<32x16xf32, #tpu.memory_space<vmem>>, %arg5: memref<16x32xf32, #tpu.memory_space<vmem>>, %arg6: memref<1x32xf32, #tpu.memory_space<vmem>>, %arg7: memref<32x128xbf16, #tpu.memory_space<vmem>>, %arg8: memref<32x16xf32, #tpu.memory_space<vmem>>, %arg9: memref<1x16xf32, #tpu.memory_space<vmem>>, %arg10: memref<32x128xbf16, #tpu.memory_space<vmem>>, %arg11: memref<32x32xbf16, #tpu.memory_space<vmem>>, %arg12: memref<32x16xf32, #tpu.memory_space<vmem>>) attributes {dimension_semantics = [#tpu.dimension_semantics<parallel>], iteration_bounds = array<i64: 1>, scalar_prefetch = 0 : i64, scratch_operands = 0 : i64, tpu.core_type = #tpu.core_type<tc>, window_params = [{transform_indices = @transform_0, window_bounds = array<i64: 32, 32>}, {transform_indices = @transform_1, window_bounds = array<i64: 32, 32>}, {transform_indices = @transform_2, window_bounds = array<i64: 32, 32>}, {transform_indices = @transform_3, window_bounds = array<i64: 32, 16>}, {pipeline_mode = #tpu.pipeline_mode<synchronous>, transform_indices = @transform_4, window_bounds = array<i64: 16, 32>}, {pipeline_mode = #tpu.pipeline_mode<synchronous>, transform_indices = @transform_5, window_bounds = array<i64: 1, 32>}, {pipeline_mode = #tpu.pipeline_mode<synchronous>, transform_indices = @transform_6, window_bounds = array<i64: 32, 128>}, {pipeline_mode = #tpu.pipeline_mode<synchronous>, transform_indices = @transform_7, window_bounds = array<i64: 32, 16>}, {pipeline_mode = #tpu.pipeline_mode<synchronous>, transform_indices = @transform_8, window_bounds = array<i64: 1, 16>}, {transform_indices = @transform_9, window_bounds = array<i64: 32, 128>}, {transform_indices = @transform_10, window_bounds = array<i64: 32, 32>}, {transform_indices = @transform_11, window_bounds = array<i64: 32, 16>}]} {
    %c0 = arith.constant 0 : index
    %c0_0 = arith.constant 0 : index
    %0 = vector.load %arg4[%c0, %c0_0] : memref<32x16xf32, #tpu.memory_space<vmem>>, vector<32x16xf32>
    %1 = arith.truncf %0 : vector<32x16xf32> to vector<32x16xbf16>
    %c0_1 = arith.constant 0 : index
    %c0_2 = arith.constant 0 : index
    %2 = vector.load %arg5[%c0_1, %c0_2] : memref<16x32xf32, #tpu.memory_space<vmem>>, vector<16x32xf32>
    %3 = arith.truncf %2 : vector<16x32xf32> to vector<16x32xbf16>
    %cst = arith.constant dense<0.000000e+00> : vector<32x32xf32>
    %4 = tpu.matmul %1, %3, %cst {dimension_numbers = #tpu.dot_dimension_numbers<[1], [0], [0], [1], [0, 0, 1, 1], [], []>} : vector<32x16xbf16>, vector<16x32xbf16>, vector<32x32xf32> -> vector<32x32xf32>
    %c0_3 = arith.constant 0 : index
    %c0_4 = arith.constant 0 : index
    %5 = vector.load %arg6[%c0_3, %c0_4] : memref<1x32xf32, #tpu.memory_space<vmem>>, vector<1x32xf32>
    %6 = vector.broadcast %5 : vector<1x32xf32> to vector<32x32xf32>
    %7 = arith.addf %4, %6 : vector<32x32xf32>
    %c0_5 = arith.constant 0 : index
    %c0_6 = arith.constant 0 : index
    %8 = vector.load %arg1[%c0_5, %c0_6] : memref<32x32xbf16, #tpu.memory_space<vmem>>, vector<32x32xbf16>
    %9 = arith.extf %8 : vector<32x32xbf16> to vector<32x32xf32>
    %c0_7 = arith.constant 0 : index
    %c0_8 = arith.constant 0 : index
    %10 = vector.load %arg2[%c0_7, %c0_8] : memref<32x32xbf16, #tpu.memory_space<vmem>>, vector<32x32xbf16>
    %11 = arith.extf %10 : vector<32x32xbf16> to vector<32x32xf32>
    %12 = arith.addf %11, %7 : vector<32x32xf32>
    %13 = arith.mulf %9, %12 : vector<32x32xf32>
    %14 = arith.truncf %13 : vector<32x32xf32> to vector<32x32xbf16>
    %c0_9 = arith.constant 0 : index
    %c0_10 = arith.constant 0 : index
    %15 = vector.load %arg3[%c0_9, %c0_10] : memref<32x32xbf16, #tpu.memory_space<vmem>>, vector<32x32xbf16>
    %16 = arith.extf %15 : vector<32x32xbf16> to vector<32x32xf32>
    %17 = arith.addf %16, %7 : vector<32x32xf32>
    %18 = arith.truncf %17 : vector<32x32xf32> to vector<32x32xbf16>
    %c0_11 = arith.constant 0 : index
    %c0_12 = arith.constant 0 : index
    %19 = vector.load %arg11[%c0_11, %c0_12] : memref<32x32xbf16, #tpu.memory_space<vmem>>, vector<32x32xbf16>
    tpu.vector_store %arg11[%c0_11, %c0_12], %18 {strides = array<i32>} : memref<32x32xbf16, #tpu.memory_space<vmem>>, vector<32x32xbf16>,
    %c0_13 = arith.constant 0 : index
    %c0_14 = arith.constant 0 : index
    %20 = vector.load %arg7[%c0_13, %c0_14] : memref<32x128xbf16, #tpu.memory_space<vmem>>, vector<32x128xbf16>
    %cst_15 = arith.constant dense<0.000000e+00> : vector<32x128xf32>
    %21 = tpu.matmul %14, %20, %cst_15 {dimension_numbers = #tpu.dot_dimension_numbers<[1], [0], [0], [1], [0, 0, 1, 1], [], []>} : vector<32x32xbf16>, vector<32x128xbf16>, vector<32x128xf32> -> vector<32x128xf32>
    %cst_16 = arith.constant 0.353553385 : f32
    %22 = vector.broadcast %cst_16 : f32 to vector<32x128xf32>
    %23 = arith.mulf %21, %22 : vector<32x128xf32>
    %24 = arith.truncf %23 : vector<32x128xf32> to vector<32x128xbf16>
    %c0_17 = arith.constant 0 : index
    %c0_18 = arith.constant 0 : index
    %25 = vector.load %arg10[%c0_17, %c0_18] : memref<32x128xbf16, #tpu.memory_space<vmem>>, vector<32x128xbf16>
    tpu.vector_store %arg10[%c0_17, %c0_18], %24 {strides = array<i32>} : memref<32x128xbf16, #tpu.memory_space<vmem>>, vector<32x128xbf16>,
    %c0_19 = arith.constant 0 : index
    %c0_20 = arith.constant 0 : index
    %26 = vector.load %arg8[%c0_19, %c0_20] : memref<32x16xf32, #tpu.memory_space<vmem>>, vector<32x16xf32>
    %27 = arith.truncf %26 : vector<32x16xf32> to vector<32x16xbf16>
    %cst_21 = arith.constant dense<0.000000e+00> : vector<32x16xf32>
    %28 = tpu.matmul %14, %27, %cst_21 {dimension_numbers = #tpu.dot_dimension_numbers<[1], [0], [0], [1], [0, 0, 1, 1], [], []>} : vector<32x32xbf16>, vector<32x16xbf16>, vector<32x16xf32> -> vector<32x16xf32>
    %c0_22 = arith.constant 0 : index
    %c0_23 = arith.constant 0 : index
    %29 = vector.load %arg9[%c0_22, %c0_23] : memref<1x16xf32, #tpu.memory_space<vmem>>, vector<1x16xf32>
    %30 = vector.broadcast %29 : vector<1x16xf32> to vector<32x16xf32>
    %31 = arith.addf %28, %30 : vector<32x16xf32>
    %c0_24 = arith.constant 0 : index
    %c0_25 = arith.constant 0 : index
    %32 = vector.load %arg12[%c0_24, %c0_25] : memref<32x16xf32, #tpu.memory_space<vmem>>, vector<32x16xf32>
    tpu.vector_store %arg12[%c0_24, %c0_25], %31 {strides = array<i32>} : memref<32x16xf32, #tpu.memory_space<vmem>>, vector<32x16xf32>,
    return
  }
  func.func @transform_0(%arg0: i32) -> (i32, i32) {
    %c0_i32 = arith.constant 0 : i32
    %c0_i32_0 = arith.constant 0 : i32
    return %arg0, %c0_i32 : i32, i32
  }
  func.func @transform_1(%arg0: i32) -> (i32, i32) {
    %c0_i32 = arith.constant 0 : i32
    %c0_i32_0 = arith.constant 0 : i32
    return %arg0, %c0_i32 : i32, i32
  }
  func.func @transform_2(%arg0: i32) -> (i32, i32) {
    %c0_i32 = arith.constant 0 : i32
    %c0_i32_0 = arith.constant 0 : i32
    return %arg0, %c0_i32 : i32, i32
  }
  func.func @transform_3(%arg0: i32) -> (i32, i32) {
    %c0_i32 = arith.constant 0 : i32
    %c0_i32_0 = arith.constant 0 : i32
    return %arg0, %c0_i32 : i32, i32
  }
  func.func @transform_4(%arg0: i32) -> (i32, i32) {
    %c0_i32 = arith.constant 0 : i32
    %c0_i32_0 = arith.constant 0 : i32
    %c0_i32_1 = arith.constant 0 : i32
    return %c0_i32, %c0_i32_0 : i32, i32
  }
  func.func @transform_5(%arg0: i32) -> (i32, i32) {
    %c0_i32 = arith.constant 0 : i32
    %c0_i32_0 = arith.constant 0 : i32
    %c0_i32_1 = arith.constant 0 : i32
    return %c0_i32, %c0_i32_0 : i32, i32
  }
  func.func @transform_6(%arg0: i32) -> (i32, i32) {
    %c0_i32 = arith.constant 0 : i32
    %c0_i32_0 = arith.constant 0 : i32
    %c0_i32_1 = arith.constant 0 : i32
    return %c0_i32, %c0_i32_0 : i32, i32
  }
  func.func @transform_7(%arg0: i32) -> (i32, i32) {
    %c0_i32 = arith.constant 0 : i32
    %c0_i32_0 = arith.constant 0 : i32
    %c0_i32_1 = arith.constant 0 : i32
    return %c0_i32, %c0_i32_0 : i32, i32
  }
  func.func @transform_8(%arg0: i32) -> (i32, i32) {
    %c0_i32 = arith.constant 0 : i32
    %c0_i32_0 = arith.constant 0 : i32
    %c0_i32_1 = arith.constant 0 : i32
    return %c0_i32, %c0_i32_0 : i32, i32
  }
  func.func @transform_9(%arg0: i32) -> (i32, i32) {
    %c0_i32 = arith.constant 0 : i32
    %c0_i32_0 = arith.constant 0 : i32
    return %arg0, %c0_i32 : i32, i32
  }
  func.func @transform_10(%arg0: i32) -> (i32, i32) {
    %c0_i32 = arith.constant 0 : i32
    %c0_i32_0 = arith.constant 0 : i32
    return %arg0, %c0_i32 : i32, i32
  }
  func.func @transform_11(%arg0: i32) -> (i32, i32) {
    %c0_i32 = arith.constant 0 : i32
    %c0_i32_0 = arith.constant 0 : i32
    return %arg0, %c0_i32 : i32, i32
  }
}

module attributes {stable_mosaic.version = 11 : i64} {
  func.func @_e_epilogue_kernel(%arg0: i32, %arg1: memref<32x16xf32, #tpu.memory_space<vmem>>, %arg2: memref<32x16xf32, #tpu.memory_space<vmem>>, %arg3: memref<1x16xf32, #tpu.memory_space<vmem>>, %arg4: memref<1x16xf32, #tpu.memory_space<vmem>>, %arg5: memref<16x32xf32, #tpu.memory_space<vmem>>, %arg6: memref<1x32xf32, #tpu.memory_space<vmem>>, %arg7: memref<32x16xf32, #tpu.memory_space<vmem>>, %arg8: memref<1x16xf32, #tpu.memory_space<vmem>>, %arg9: memref<1x16xf32, #tpu.memory_space<vmem>>, %arg10: memref<1x16xf32, #tpu.memory_space<vmem>>, %arg11: memref<32x16xf32, #tpu.memory_space<vmem>>) attributes {dimension_semantics = [#tpu.dimension_semantics<parallel>], iteration_bounds = array<i64: 1>, scalar_prefetch = 0 : i64, scratch_operands = 0 : i64, tpu.core_type = #tpu.core_type<tc>, window_params = [{transform_indices = @transform_0, window_bounds = array<i64: 32, 16>}, {transform_indices = @transform_1, window_bounds = array<i64: 32, 16>}, {pipeline_mode = #tpu.pipeline_mode<synchronous>, transform_indices = @transform_2, window_bounds = array<i64: 1, 16>}, {pipeline_mode = #tpu.pipeline_mode<synchronous>, transform_indices = @transform_3, window_bounds = array<i64: 1, 16>}, {pipeline_mode = #tpu.pipeline_mode<synchronous>, transform_indices = @transform_4, window_bounds = array<i64: 16, 32>}, {pipeline_mode = #tpu.pipeline_mode<synchronous>, transform_indices = @transform_5, window_bounds = array<i64: 1, 32>}, {pipeline_mode = #tpu.pipeline_mode<synchronous>, transform_indices = @transform_6, window_bounds = array<i64: 32, 16>}, {pipeline_mode = #tpu.pipeline_mode<synchronous>, transform_indices = @transform_7, window_bounds = array<i64: 1, 16>}, {pipeline_mode = #tpu.pipeline_mode<synchronous>, transform_indices = @transform_8, window_bounds = array<i64: 1, 16>}, {pipeline_mode = #tpu.pipeline_mode<synchronous>, transform_indices = @transform_9, window_bounds = array<i64: 1, 16>}, {transform_indices = @transform_10, window_bounds = array<i64: 32, 16>}]} {
    %c0 = arith.constant 0 : index
    %c0_0 = arith.constant 0 : index
    %0 = vector.load %arg2[%c0, %c0_0] : memref<32x16xf32, #tpu.memory_space<vmem>>, vector<32x16xf32>
    %c0_1 = arith.constant 0 : index
    %c0_2 = arith.constant 0 : index
    %1 = vector.load %arg1[%c0_1, %c0_2] : memref<32x16xf32, #tpu.memory_space<vmem>>, vector<32x16xf32>
    %2 = arith.addf %0, %1 : vector<32x16xf32>
    %c0_3 = arith.constant 0 : index
    %c0_4 = arith.constant 0 : index
    %3 = vector.load %arg3[%c0_3, %c0_4] : memref<1x16xf32, #tpu.memory_space<vmem>>, vector<1x16xf32>
    %c0_5 = arith.constant 0 : index
    %c0_6 = arith.constant 0 : index
    %4 = vector.load %arg4[%c0_5, %c0_6] : memref<1x16xf32, #tpu.memory_space<vmem>>, vector<1x16xf32>
    %cst = arith.constant dense<0.000000e+00> : vector<32xf32>
    %5 = vector.multi_reduction <add>, %2, %cst [1] : vector<32x16xf32> to vector<32xf32>
    %6 = vector.shape_cast %5 : vector<32xf32> to vector<32x1xf32>
    %cst_7 = arith.constant 1.600000e+01 : f32
    %7 = vector.broadcast %cst_7 : f32 to vector<32x1xf32>
    %8 = arith.divf %6, %7 : vector<32x1xf32>
    %9 = vector.broadcast %8 : vector<32x1xf32> to vector<32x16xf32>
    %10 = arith.subf %2, %9 : vector<32x16xf32>
    %11 = arith.mulf %10, %10 : vector<32x16xf32>
    %cst_8 = arith.constant dense<0.000000e+00> : vector<32xf32>
    %12 = vector.multi_reduction <add>, %11, %cst_8 [1] : vector<32x16xf32> to vector<32xf32>
    %13 = vector.shape_cast %12 : vector<32xf32> to vector<32x1xf32>
    %cst_9 = arith.constant 1.600000e+01 : f32
    %14 = vector.broadcast %cst_9 : f32 to vector<32x1xf32>
    %15 = arith.divf %13, %14 : vector<32x1xf32>
    %16 = vector.broadcast %8 : vector<32x1xf32> to vector<32x16xf32>
    %17 = arith.subf %2, %16 : vector<32x16xf32>
    %cst_10 = arith.constant 9.99999974E-6 : f32
    %18 = vector.broadcast %cst_10 : f32 to vector<32x1xf32>
    %19 = arith.addf %15, %18 : vector<32x1xf32>
    %20 = math.rsqrt %19 : vector<32x1xf32>
    %21 = vector.broadcast %20 : vector<32x1xf32> to vector<32x16xf32>
    %22 = arith.mulf %17, %21 : vector<32x16xf32>
    %23 = vector.broadcast %3 : vector<1x16xf32> to vector<32x16xf32>
    %24 = arith.mulf %22, %23 : vector<32x16xf32>
    %25 = vector.broadcast %4 : vector<1x16xf32> to vector<32x16xf32>
    %26 = arith.addf %24, %25 : vector<32x16xf32>
    %27 = arith.truncf %26 : vector<32x16xf32> to vector<32x16xbf16>
    %c0_11 = arith.constant 0 : index
    %c0_12 = arith.constant 0 : index
    %28 = vector.load %arg5[%c0_11, %c0_12] : memref<16x32xf32, #tpu.memory_space<vmem>>, vector<16x32xf32>
    %29 = arith.truncf %28 : vector<16x32xf32> to vector<16x32xbf16>
    %cst_13 = arith.constant dense<0.000000e+00> : vector<32x32xf32>
    %30 = tpu.matmul %27, %29, %cst_13 {dimension_numbers = #tpu.dot_dimension_numbers<[1], [0], [0], [1], [0, 0, 1, 1], [], []>} : vector<32x16xbf16>, vector<16x32xbf16>, vector<32x32xf32> -> vector<32x32xf32>
    %c0_14 = arith.constant 0 : index
    %c0_15 = arith.constant 0 : index
    %31 = vector.load %arg6[%c0_14, %c0_15] : memref<1x32xf32, #tpu.memory_space<vmem>>, vector<1x32xf32>
    %32 = vector.broadcast %31 : vector<1x32xf32> to vector<32x32xf32>
    %33 = arith.addf %30, %32 : vector<32x32xf32>
    %cst_16 = arith.constant 0.000000e+00 : f32
    %34 = vector.broadcast %cst_16 : f32 to vector<32x32xf32>
    %35 = arith.maximumf %33, %34 : vector<32x32xf32>
    %36 = arith.truncf %35 : vector<32x32xf32> to vector<32x32xbf16>
    %c0_17 = arith.constant 0 : index
    %c0_18 = arith.constant 0 : index
    %37 = vector.load %arg7[%c0_17, %c0_18] : memref<32x16xf32, #tpu.memory_space<vmem>>, vector<32x16xf32>
    %38 = arith.truncf %37 : vector<32x16xf32> to vector<32x16xbf16>
    %cst_19 = arith.constant dense<0.000000e+00> : vector<32x16xf32>
    %39 = tpu.matmul %36, %38, %cst_19 {dimension_numbers = #tpu.dot_dimension_numbers<[1], [0], [0], [1], [0, 0, 1, 1], [], []>} : vector<32x32xbf16>, vector<32x16xbf16>, vector<32x16xf32> -> vector<32x16xf32>
    %c0_20 = arith.constant 0 : index
    %c0_21 = arith.constant 0 : index
    %40 = vector.load %arg8[%c0_20, %c0_21] : memref<1x16xf32, #tpu.memory_space<vmem>>, vector<1x16xf32>
    %41 = vector.broadcast %40 : vector<1x16xf32> to vector<32x16xf32>
    %42 = arith.addf %39, %41 : vector<32x16xf32>
    %43 = arith.addf %26, %42 : vector<32x16xf32>
    %c0_22 = arith.constant 0 : index
    %c0_23 = arith.constant 0 : index
    %44 = vector.load %arg9[%c0_22, %c0_23] : memref<1x16xf32, #tpu.memory_space<vmem>>, vector<1x16xf32>
    %c0_24 = arith.constant 0 : index
    %c0_25 = arith.constant 0 : index
    %45 = vector.load %arg10[%c0_24, %c0_25] : memref<1x16xf32, #tpu.memory_space<vmem>>, vector<1x16xf32>
    %cst_26 = arith.constant dense<0.000000e+00> : vector<32xf32>
    %46 = vector.multi_reduction <add>, %43, %cst_26 [1] : vector<32x16xf32> to vector<32xf32>
    %47 = vector.shape_cast %46 : vector<32xf32> to vector<32x1xf32>
    %cst_27 = arith.constant 1.600000e+01 : f32
    %48 = vector.broadcast %cst_27 : f32 to vector<32x1xf32>
    %49 = arith.divf %47, %48 : vector<32x1xf32>
    %50 = vector.broadcast %49 : vector<32x1xf32> to vector<32x16xf32>
    %51 = arith.subf %43, %50 : vector<32x16xf32>
    %52 = arith.mulf %51, %51 : vector<32x16xf32>
    %cst_28 = arith.constant dense<0.000000e+00> : vector<32xf32>
    %53 = vector.multi_reduction <add>, %52, %cst_28 [1] : vector<32x16xf32> to vector<32xf32>
    %54 = vector.shape_cast %53 : vector<32xf32> to vector<32x1xf32>
    %cst_29 = arith.constant 1.600000e+01 : f32
    %55 = vector.broadcast %cst_29 : f32 to vector<32x1xf32>
    %56 = arith.divf %54, %55 : vector<32x1xf32>
    %57 = vector.broadcast %49 : vector<32x1xf32> to vector<32x16xf32>
    %58 = arith.subf %43, %57 : vector<32x16xf32>
    %cst_30 = arith.constant 9.99999974E-6 : f32
    %59 = vector.broadcast %cst_30 : f32 to vector<32x1xf32>
    %60 = arith.addf %56, %59 : vector<32x1xf32>
    %61 = math.rsqrt %60 : vector<32x1xf32>
    %62 = vector.broadcast %61 : vector<32x1xf32> to vector<32x16xf32>
    %63 = arith.mulf %58, %62 : vector<32x16xf32>
    %64 = vector.broadcast %44 : vector<1x16xf32> to vector<32x16xf32>
    %65 = arith.mulf %63, %64 : vector<32x16xf32>
    %66 = vector.broadcast %45 : vector<1x16xf32> to vector<32x16xf32>
    %67 = arith.addf %65, %66 : vector<32x16xf32>
    %c0_31 = arith.constant 0 : index
    %c0_32 = arith.constant 0 : index
    %68 = vector.load %arg11[%c0_31, %c0_32] : memref<32x16xf32, #tpu.memory_space<vmem>>, vector<32x16xf32>
    tpu.vector_store %arg11[%c0_31, %c0_32], %67 {strides = array<i32>} : memref<32x16xf32, #tpu.memory_space<vmem>>, vector<32x16xf32>,
    return
  }
  func.func @transform_0(%arg0: i32) -> (i32, i32) {
    %c0_i32 = arith.constant 0 : i32
    %c0_i32_0 = arith.constant 0 : i32
    return %arg0, %c0_i32 : i32, i32
  }
  func.func @transform_1(%arg0: i32) -> (i32, i32) {
    %c0_i32 = arith.constant 0 : i32
    %c0_i32_0 = arith.constant 0 : i32
    return %arg0, %c0_i32 : i32, i32
  }
  func.func @transform_2(%arg0: i32) -> (i32, i32) {
    %c0_i32 = arith.constant 0 : i32
    %c0_i32_0 = arith.constant 0 : i32
    %c0_i32_1 = arith.constant 0 : i32
    return %c0_i32, %c0_i32_0 : i32, i32
  }
  func.func @transform_3(%arg0: i32) -> (i32, i32) {
    %c0_i32 = arith.constant 0 : i32
    %c0_i32_0 = arith.constant 0 : i32
    %c0_i32_1 = arith.constant 0 : i32
    return %c0_i32, %c0_i32_0 : i32, i32
  }
  func.func @transform_4(%arg0: i32) -> (i32, i32) {
    %c0_i32 = arith.constant 0 : i32
    %c0_i32_0 = arith.constant 0 : i32
    %c0_i32_1 = arith.constant 0 : i32
    return %c0_i32, %c0_i32_0 : i32, i32
  }
  func.func @transform_5(%arg0: i32) -> (i32, i32) {
    %c0_i32 = arith.constant 0 : i32
    %c0_i32_0 = arith.constant 0 : i32
    %c0_i32_1 = arith.constant 0 : i32
    return %c0_i32, %c0_i32_0 : i32, i32
  }
  func.func @transform_6(%arg0: i32) -> (i32, i32) {
    %c0_i32 = arith.constant 0 : i32
    %c0_i32_0 = arith.constant 0 : i32
    %c0_i32_1 = arith.constant 0 : i32
    return %c0_i32, %c0_i32_0 : i32, i32
  }
  func.func @transform_7(%arg0: i32) -> (i32, i32) {
    %c0_i32 = arith.constant 0 : i32
    %c0_i32_0 = arith.constant 0 : i32
    %c0_i32_1 = arith.constant 0 : i32
    return %c0_i32, %c0_i32_0 : i32, i32
  }
  func.func @transform_8(%arg0: i32) -> (i32, i32) {
    %c0_i32 = arith.constant 0 : i32
    %c0_i32_0 = arith.constant 0 : i32
    %c0_i32_1 = arith.constant 0 : i32
    return %c0_i32, %c0_i32_0 : i32, i32
  }
  func.func @transform_9(%arg0: i32) -> (i32, i32) {
    %c0_i32 = arith.constant 0 : i32
    %c0_i32_0 = arith.constant 0 : i32
    %c0_i32_1 = arith.constant 0 : i32
    return %c0_i32, %c0_i32_0 : i32, i32
  }
  func.func @transform_10(%arg0: i32) -> (i32, i32) {
    %c0_i32 = arith.constant 0 : i32
    %c0_i32_0 = arith.constant 0 : i32
    return %arg0, %c0_i32 : i32, i32
  }
}

module attributes {stable_mosaic.version = 11 : i64} {
  func.func @_x_epilogue_kernel(%arg0: i32, %arg1: memref<16x32xf32, #tpu.memory_space<vmem>>, %arg2: memref<16x32xf32, #tpu.memory_space<vmem>>, %arg3: memref<32x32xf32, #tpu.memory_space<vmem>>, %arg4: memref<1x32xf32, #tpu.memory_space<vmem>>, %arg5: memref<1x32xf32, #tpu.memory_space<vmem>>, %arg6: memref<1x32xf32, #tpu.memory_space<vmem>>, %arg7: memref<32x64xf32, #tpu.memory_space<vmem>>, %arg8: memref<1x64xf32, #tpu.memory_space<vmem>>, %arg9: memref<64x32xf32, #tpu.memory_space<vmem>>, %arg10: memref<1x32xf32, #tpu.memory_space<vmem>>, %arg11: memref<1x32xf32, #tpu.memory_space<vmem>>, %arg12: memref<1x32xf32, #tpu.memory_space<vmem>>, %arg13: memref<16x32xf32, #tpu.memory_space<vmem>>) attributes {dimension_semantics = [#tpu.dimension_semantics<parallel>], iteration_bounds = array<i64: 1>, scalar_prefetch = 0 : i64, scratch_operands = 0 : i64, tpu.core_type = #tpu.core_type<tc>, window_params = [{transform_indices = @transform_0, window_bounds = array<i64: 16, 32>}, {transform_indices = @transform_1, window_bounds = array<i64: 16, 32>}, {pipeline_mode = #tpu.pipeline_mode<synchronous>, transform_indices = @transform_2, window_bounds = array<i64: 32, 32>}, {pipeline_mode = #tpu.pipeline_mode<synchronous>, transform_indices = @transform_3, window_bounds = array<i64: 1, 32>}, {pipeline_mode = #tpu.pipeline_mode<synchronous>, transform_indices = @transform_4, window_bounds = array<i64: 1, 32>}, {pipeline_mode = #tpu.pipeline_mode<synchronous>, transform_indices = @transform_5, window_bounds = array<i64: 1, 32>}, {pipeline_mode = #tpu.pipeline_mode<synchronous>, transform_indices = @transform_6, window_bounds = array<i64: 32, 64>}, {pipeline_mode = #tpu.pipeline_mode<synchronous>, transform_indices = @transform_7, window_bounds = array<i64: 1, 64>}, {pipeline_mode = #tpu.pipeline_mode<synchronous>, transform_indices = @transform_8, window_bounds = array<i64: 64, 32>}, {pipeline_mode = #tpu.pipeline_mode<synchronous>, transform_indices = @transform_9, window_bounds = array<i64: 1, 32>}, {pipeline_mode = #tpu.pipeline_mode<synchronous>, transform_indices = @transform_10, window_bounds = array<i64: 1, 32>}, {pipeline_mode = #tpu.pipeline_mode<synchronous>, transform_indices = @transform_11, window_bounds = array<i64: 1, 32>}, {transform_indices = @transform_12, window_bounds = array<i64: 16, 32>}]} {
    %c0 = arith.constant 0 : index
    %c0_0 = arith.constant 0 : index
    %0 = vector.load %arg1[%c0, %c0_0] : memref<16x32xf32, #tpu.memory_space<vmem>>, vector<16x32xf32>
    %1 = arith.truncf %0 : vector<16x32xf32> to vector<16x32xbf16>
    %c0_1 = arith.constant 0 : index
    %c0_2 = arith.constant 0 : index
    %2 = vector.load %arg3[%c0_1, %c0_2] : memref<32x32xf32, #tpu.memory_space<vmem>>, vector<32x32xf32>
    %3 = arith.truncf %2 : vector<32x32xf32> to vector<32x32xbf16>
    %cst = arith.constant dense<0.000000e+00> : vector<16x32xf32>
    %4 = tpu.matmul %1, %3, %cst {dimension_numbers = #tpu.dot_dimension_numbers<[1], [0], [0], [1], [0, 0, 1, 1], [], []>} : vector<16x32xbf16>, vector<32x32xbf16>, vector<16x32xf32> -> vector<16x32xf32>
    %c0_3 = arith.constant 0 : index
    %c0_4 = arith.constant 0 : index
    %5 = vector.load %arg4[%c0_3, %c0_4] : memref<1x32xf32, #tpu.memory_space<vmem>>, vector<1x32xf32>
    %6 = vector.broadcast %5 : vector<1x32xf32> to vector<16x32xf32>
    %7 = arith.addf %4, %6 : vector<16x32xf32>
    %c0_5 = arith.constant 0 : index
    %c0_6 = arith.constant 0 : index
    %8 = vector.load %arg2[%c0_5, %c0_6] : memref<16x32xf32, #tpu.memory_space<vmem>>, vector<16x32xf32>
    %9 = arith.addf %8, %7 : vector<16x32xf32>
    %c0_7 = arith.constant 0 : index
    %c0_8 = arith.constant 0 : index
    %10 = vector.load %arg5[%c0_7, %c0_8] : memref<1x32xf32, #tpu.memory_space<vmem>>, vector<1x32xf32>
    %c0_9 = arith.constant 0 : index
    %c0_10 = arith.constant 0 : index
    %11 = vector.load %arg6[%c0_9, %c0_10] : memref<1x32xf32, #tpu.memory_space<vmem>>, vector<1x32xf32>
    %cst_11 = arith.constant dense<0.000000e+00> : vector<16xf32>
    %12 = vector.multi_reduction <add>, %9, %cst_11 [1] : vector<16x32xf32> to vector<16xf32>
    %13 = vector.shape_cast %12 : vector<16xf32> to vector<16x1xf32>
    %cst_12 = arith.constant 3.200000e+01 : f32
    %14 = vector.broadcast %cst_12 : f32 to vector<16x1xf32>
    %15 = arith.divf %13, %14 : vector<16x1xf32>
    %16 = vector.broadcast %15 : vector<16x1xf32> to vector<16x32xf32>
    %17 = arith.subf %9, %16 : vector<16x32xf32>
    %18 = arith.mulf %17, %17 : vector<16x32xf32>
    %cst_13 = arith.constant dense<0.000000e+00> : vector<16xf32>
    %19 = vector.multi_reduction <add>, %18, %cst_13 [1] : vector<16x32xf32> to vector<16xf32>
    %20 = vector.shape_cast %19 : vector<16xf32> to vector<16x1xf32>
    %cst_14 = arith.constant 3.200000e+01 : f32
    %21 = vector.broadcast %cst_14 : f32 to vector<16x1xf32>
    %22 = arith.divf %20, %21 : vector<16x1xf32>
    %23 = vector.broadcast %15 : vector<16x1xf32> to vector<16x32xf32>
    %24 = arith.subf %9, %23 : vector<16x32xf32>
    %cst_15 = arith.constant 9.99999974E-6 : f32
    %25 = vector.broadcast %cst_15 : f32 to vector<16x1xf32>
    %26 = arith.addf %22, %25 : vector<16x1xf32>
    %27 = math.rsqrt %26 : vector<16x1xf32>
    %28 = vector.broadcast %27 : vector<16x1xf32> to vector<16x32xf32>
    %29 = arith.mulf %24, %28 : vector<16x32xf32>
    %30 = vector.broadcast %10 : vector<1x32xf32> to vector<16x32xf32>
    %31 = arith.mulf %29, %30 : vector<16x32xf32>
    %32 = vector.broadcast %11 : vector<1x32xf32> to vector<16x32xf32>
    %33 = arith.addf %31, %32 : vector<16x32xf32>
    %34 = arith.truncf %33 : vector<16x32xf32> to vector<16x32xbf16>
    %c0_16 = arith.constant 0 : index
    %c0_17 = arith.constant 0 : index
    %35 = vector.load %arg7[%c0_16, %c0_17] : memref<32x64xf32, #tpu.memory_space<vmem>>, vector<32x64xf32>
    %36 = arith.truncf %35 : vector<32x64xf32> to vector<32x64xbf16>
    %cst_18 = arith.constant dense<0.000000e+00> : vector<16x64xf32>
    %37 = tpu.matmul %34, %36, %cst_18 {dimension_numbers = #tpu.dot_dimension_numbers<[1], [0], [0], [1], [0, 0, 1, 1], [], []>} : vector<16x32xbf16>, vector<32x64xbf16>, vector<16x64xf32> -> vector<16x64xf32>
    %c0_19 = arith.constant 0 : index
    %c0_20 = arith.constant 0 : index
    %38 = vector.load %arg8[%c0_19, %c0_20] : memref<1x64xf32, #tpu.memory_space<vmem>>, vector<1x64xf32>
    %39 = vector.broadcast %38 : vector<1x64xf32> to vector<16x64xf32>
    %40 = arith.addf %37, %39 : vector<16x64xf32>
    %cst_21 = arith.constant 0.000000e+00 : f32
    %41 = vector.broadcast %cst_21 : f32 to vector<16x64xf32>
    %42 = arith.maximumf %40, %41 : vector<16x64xf32>
    %43 = arith.truncf %42 : vector<16x64xf32> to vector<16x64xbf16>
    %c0_22 = arith.constant 0 : index
    %c0_23 = arith.constant 0 : index
    %44 = vector.load %arg9[%c0_22, %c0_23] : memref<64x32xf32, #tpu.memory_space<vmem>>, vector<64x32xf32>
    %45 = arith.truncf %44 : vector<64x32xf32> to vector<64x32xbf16>
    %cst_24 = arith.constant dense<0.000000e+00> : vector<16x32xf32>
    %46 = tpu.matmul %43, %45, %cst_24 {dimension_numbers = #tpu.dot_dimension_numbers<[1], [0], [0], [1], [0, 0, 1, 1], [], []>} : vector<16x64xbf16>, vector<64x32xbf16>, vector<16x32xf32> -> vector<16x32xf32>
    %c0_25 = arith.constant 0 : index
    %c0_26 = arith.constant 0 : index
    %47 = vector.load %arg10[%c0_25, %c0_26] : memref<1x32xf32, #tpu.memory_space<vmem>>, vector<1x32xf32>
    %48 = vector.broadcast %47 : vector<1x32xf32> to vector<16x32xf32>
    %49 = arith.addf %46, %48 : vector<16x32xf32>
    %50 = arith.addf %33, %49 : vector<16x32xf32>
    %c0_27 = arith.constant 0 : index
    %c0_28 = arith.constant 0 : index
    %51 = vector.load %arg11[%c0_27, %c0_28] : memref<1x32xf32, #tpu.memory_space<vmem>>, vector<1x32xf32>
    %c0_29 = arith.constant 0 : index
    %c0_30 = arith.constant 0 : index
    %52 = vector.load %arg12[%c0_29, %c0_30] : memref<1x32xf32, #tpu.memory_space<vmem>>, vector<1x32xf32>
    %cst_31 = arith.constant dense<0.000000e+00> : vector<16xf32>
    %53 = vector.multi_reduction <add>, %50, %cst_31 [1] : vector<16x32xf32> to vector<16xf32>
    %54 = vector.shape_cast %53 : vector<16xf32> to vector<16x1xf32>
    %cst_32 = arith.constant 3.200000e+01 : f32
    %55 = vector.broadcast %cst_32 : f32 to vector<16x1xf32>
    %56 = arith.divf %54, %55 : vector<16x1xf32>
    %57 = vector.broadcast %56 : vector<16x1xf32> to vector<16x32xf32>
    %58 = arith.subf %50, %57 : vector<16x32xf32>
    %59 = arith.mulf %58, %58 : vector<16x32xf32>
    %cst_33 = arith.constant dense<0.000000e+00> : vector<16xf32>
    %60 = vector.multi_reduction <add>, %59, %cst_33 [1] : vector<16x32xf32> to vector<16xf32>
    %61 = vector.shape_cast %60 : vector<16xf32> to vector<16x1xf32>
    %cst_34 = arith.constant 3.200000e+01 : f32
    %62 = vector.broadcast %cst_34 : f32 to vector<16x1xf32>
    %63 = arith.divf %61, %62 : vector<16x1xf32>
    %64 = vector.broadcast %56 : vector<16x1xf32> to vector<16x32xf32>
    %65 = arith.subf %50, %64 : vector<16x32xf32>
    %cst_35 = arith.constant 9.99999974E-6 : f32
    %66 = vector.broadcast %cst_35 : f32 to vector<16x1xf32>
    %67 = arith.addf %63, %66 : vector<16x1xf32>
    %68 = math.rsqrt %67 : vector<16x1xf32>
    %69 = vector.broadcast %68 : vector<16x1xf32> to vector<16x32xf32>
    %70 = arith.mulf %65, %69 : vector<16x32xf32>
    %71 = vector.broadcast %51 : vector<1x32xf32> to vector<16x32xf32>
    %72 = arith.mulf %70, %71 : vector<16x32xf32>
    %73 = vector.broadcast %52 : vector<1x32xf32> to vector<16x32xf32>
    %74 = arith.addf %72, %73 : vector<16x32xf32>
    %c0_36 = arith.constant 0 : index
    %c0_37 = arith.constant 0 : index
    %75 = vector.load %arg13[%c0_36, %c0_37] : memref<16x32xf32, #tpu.memory_space<vmem>>, vector<16x32xf32>
    tpu.vector_store %arg13[%c0_36, %c0_37], %74 {strides = array<i32>} : memref<16x32xf32, #tpu.memory_space<vmem>>, vector<16x32xf32>,
    return
  }
  func.func @transform_0(%arg0: i32) -> (i32, i32) {
    %c0_i32 = arith.constant 0 : i32
    %c0_i32_0 = arith.constant 0 : i32
    return %arg0, %c0_i32 : i32, i32
  }
  func.func @transform_1(%arg0: i32) -> (i32, i32) {
    %c0_i32 = arith.constant 0 : i32
    %c0_i32_0 = arith.constant 0 : i32
    return %arg0, %c0_i32 : i32, i32
  }
  func.func @transform_2(%arg0: i32) -> (i32, i32) {
    %c0_i32 = arith.constant 0 : i32
    %c0_i32_0 = arith.constant 0 : i32
    %c0_i32_1 = arith.constant 0 : i32
    return %c0_i32, %c0_i32_0 : i32, i32
  }
  func.func @transform_3(%arg0: i32) -> (i32, i32) {
    %c0_i32 = arith.constant 0 : i32
    %c0_i32_0 = arith.constant 0 : i32
    %c0_i32_1 = arith.constant 0 : i32
    return %c0_i32, %c0_i32_0 : i32, i32
  }
  func.func @transform_4(%arg0: i32) -> (i32, i32) {
    %c0_i32 = arith.constant 0 : i32
    %c0_i32_0 = arith.constant 0 : i32
    %c0_i32_1 = arith.constant 0 : i32
    return %c0_i32, %c0_i32_0 : i32, i32
  }
  func.func @transform_5(%arg0: i32) -> (i32, i32) {
    %c0_i32 = arith.constant 0 : i32
    %c0_i32_0 = arith.constant 0 : i32
    %c0_i32_1 = arith.constant 0 : i32
    return %c0_i32, %c0_i32_0 : i32, i32
  }
  func.func @transform_6(%arg0: i32) -> (i32, i32) {
    %c0_i32 = arith.constant 0 : i32
    %c0_i32_0 = arith.constant 0 : i32
    %c0_i32_1 = arith.constant 0 : i32
    return %c0_i32, %c0_i32_0 : i32, i32
  }
  func.func @transform_7(%arg0: i32) -> (i32, i32) {
    %c0_i32 = arith.constant 0 : i32
    %c0_i32_0 = arith.constant 0 : i32
    %c0_i32_1 = arith.constant 0 : i32
    return %c0_i32, %c0_i32_0 : i32, i32
  }
  func.func @transform_8(%arg0: i32) -> (i32, i32) {
    %c0_i32 = arith.constant 0 : i32
    %c0_i32_0 = arith.constant 0 : i32
    %c0_i32_1 = arith.constant 0 : i32
    return %c0_i32, %c0_i32_0 : i32, i32
  }
  func.func @transform_9(%arg0: i32) -> (i32, i32) {
    %c0_i32 = arith.constant 0 : i32
    %c0_i32_0 = arith.constant 0 : i32
    %c0_i32_1 = arith.constant 0 : i32
    return %c0_i32, %c0_i32_0 : i32, i32
  }
  func.func @transform_10(%arg0: i32) -> (i32, i32) {
    %c0_i32 = arith.constant 0 : i32
    %c0_i32_0 = arith.constant 0 : i32
    %c0_i32_1 = arith.constant 0 : i32
    return %c0_i32, %c0_i32_0 : i32, i32
  }
  func.func @transform_11(%arg0: i32) -> (i32, i32) {
    %c0_i32 = arith.constant 0 : i32
    %c0_i32_0 = arith.constant 0 : i32
    %c0_i32_1 = arith.constant 0 : i32
    return %c0_i32, %c0_i32_0 : i32, i32
  }
  func.func @transform_12(%arg0: i32) -> (i32, i32) {
    %c0_i32 = arith.constant 0 : i32
    %c0_i32_0 = arith.constant 0 : i32
    return %arg0, %c0_i32 : i32, i32
  }
}

</mosaic_0001>

<llo_original>
// kernel: xey_transformer_layer.4
$region0: #{xey_transformer_layer.4}
  #allocation0 [shape = 'u32[]', space=smem, size = 0x4, offset = 0x4, fixed_abs, tag = 'smem constant byte address 0x4 - core index']
  #allocation1 [shape = 'u32[144,128]{1,0:T(1,128)}', space=vmem, size = 0x12000, scoped, tag = 'internal scratch']
  %s0 = inlined_call_operand.vmem [shape: f32[16,32], index: 0, kind: input, shape index: {}]
  %s1 = inlined_call_operand.vmem [shape: f32[32,128], index: 1, kind: input, shape index: {}]
  %s2 = inlined_call_operand.vmem [shape: f32[1,128], index: 2, kind: input, shape index: {}]
  %s3 = inlined_call_operand.vmem [shape: bf16[16,128], index: 3, kind: output, shape index: {}]
  %s4 = sld [smem:[#allocation0]]
  $region22: #{xey_transformer_layer.4} parent=0
    _
  %s6 = ssub.s32 1, %s4
  %s7 = scalar_select 0, %s6, %s4
  // Predicated region
  $region2: #{xey_transformer_layer.4} parent=0 // pred_check
    _
  $region3: #{xey_transformer_layer.4} parent=0 // pred_check_branch
    %9 = sbr.rel (0) target = $region5
  $region4: #{xey_transformer_layer.4} parent=0 // pred_region
    _
  $region5: #{xey_transformer_layer.4} parent=0 // pred_fallthru
    _
  // Predicated region
  $region6: #{xey_transformer_layer.4} parent=0 // pred_check
    _
  $region7: #{xey_transformer_layer.4} parent=0 // pred_check_branch
    %11 = sbr.rel (0) target = $region9
  $region8: #{xey_transformer_layer.4} parent=0 // pred_region
    _
  $region9: #{xey_transformer_layer.4} parent=0 // pred_fallthru
    _
  // Predicated region
  $region10: #{xey_transformer_layer.4} parent=0 // pred_check
    _
  $region11: #{xey_transformer_layer.4} parent=0 // pred_check_branch
    %13 = sbr.rel (0) target = $region13
  $region12: #{xey_transformer_layer.4} parent=0 // pred_region
    _
  $region13: #{xey_transformer_layer.4} parent=0 // pred_fallthru
    _
  %v15 = vld [vmem:[%s0] sm:$0xff]
  %v16 = vld [vmem:[%s0 + $0x8] sm:$0xff]
  %v17 = vpack.c.bf16 %v16, %v15
  %v18 = vld [vmem:[%s1] sm:$0xff]
  %v19 = vld [vmem:[%s1 + $0x8] sm:$0xff]
  %v20 = vld [vmem:[%s1 + $0x10] sm:$0xff]
  %v21 = vld [vmem:[%s1 + $0x18] sm:$0xff]
  %v22 = vpack.c.bf16 %v19, %v18
  %v23 = vpack.c.bf16 %v21, %v20
  %v24 = vld [vmem:[%s2] sm:$0x1]
  %v26 = vlaneseq
  %v27 = vshrl.u32 %v26, 7
  %v28 = vsub.s32 0, %v27
  %v29 = vrot.slane %v24, %v28
  %vm31 = vcmask 261120
  %v33 = vsel %vm31, %v17, 0
  %35 = vmatprep.subr.bf16.mxu0 0
  %36 = vmatpush1.bf16.msra.mxu0 %v22
  %37 = vmatprep.subr.bf16.mxu0 0
  %38 = vmatpush1.bf16.msra.mxu0 %v23
  %39 = vmatprep.subr.bf16.mxu0 0
  %40 = vmatpush1.bf16.msra.mxu0 0
  %41 = vmatprep.subr.bf16.mxu0 0
  %42 = vmatpush1.bf16.msra.mxu0 0
  %43 = vmatprep.subr.bf16.mxu0 0
  %44 = vmatpush1.bf16.msra.mxu0 0
  %45 = vmatprep.subr.bf16.mxu0 0
  %46 = vmatpush1.bf16.msra.mxu0 0
  %47 = vmatprep.subr.bf16.mxu0 0
  %48 = vmatpush1.bf16.msra.mxu0 0
  %49 = vmatprep.subr.bf16.mxu0 0
  %50 = vmatpush1.bf16.msra.mxu0 0
  %51 = vmatprep.subr.bf16.mxu0 0
  %52 = vmatpush1.bf16.msra.mxu0 0
  %53 = vmatprep.subr.bf16.mxu0 0
  %54 = vmatpush1.bf16.msra.mxu0 0
  %55 = vmatprep.subr.bf16.mxu0 0
  %56 = vmatpush1.bf16.msra.mxu0 0
  %57 = vmatprep.subr.bf16.mxu0 0
  %58 = vmatpush1.bf16.msra.mxu0 0
  %59 = vmatprep.subr.bf16.mxu0 0
  %60 = vmatpush1.bf16.msra.mxu0 0
  %61 = vmatprep.subr.bf16.mxu0 0
  %62 = vmatpush1.bf16.msra.mxu0 0
  %63 = vmatprep.subr.bf16.mxu0 0
  %64 = vmatpush1.bf16.msra.mxu0 0
  %65 = vmatprep.subr.bf16.mxu0 0
  %66 = vmatpush1.bf16.msra.mxu0 0
  %67 = vmatprep.mubr.bf16.mxu0 0
  %68 = vmatmul.mubr.bf16.gmra.mrb[0].mxu0 %v33
  %v69 = vpop.f32.mrb[0].mxu0
  %v70 = vadd.f32 %v29, %v69
  %v71 = vpop.f32.mrb[0].mxu0
  %v72 = vpop.f32.mrb[0].mxu0
  %v73 = vadd.f32 %v29, %v72
  %v74 = vpop.f32.mrb[0].mxu0
  %75 = vdwg.mxu0
  %v76 = vpack.c.bf16 %v73, %v70
  %v78 = vunpack.c.l.b16 %v76
  %v79 = vunpack.c.h.b16 %v76
  %v80 = vpack.c.b16 %v78, %v78
  %v81 = vpack.c.b16 %v79, %v79
  %84 = vst [vmem:[%s3] sm:$0xf] %v80
  %85 = vst [vmem:[%s3 + $0x4] sm:$0xf] %v81
  // Predicated region
  $region14: #{xey_transformer_layer.4} parent=0 // pred_check
    _
  $region15: #{xey_transformer_layer.4} parent=0 // pred_check_branch
    %87 = sbr.rel (0) target = $region17
  $region16: #{xey_transformer_layer.4} parent=0 // pred_region
    _
  $region17: #{xey_transformer_layer.4} parent=0 // pred_fallthru
    _
  // Predicated region
  $region18: #{xey_transformer_layer.4} parent=0 // pred_check
    _
  $region19: #{xey_transformer_layer.4} parent=0 // pred_check_branch
    %89 = sbr.rel (0) target = $region21
  $region20: #{xey_transformer_layer.4} parent=0 // pred_region
    _
  $region21: #{xey_transformer_layer.4} parent=0 // pred_fallthru
    _

// kernel: xey_transformer_layer.5
$region0: #{xey_transformer_layer.5}
  #allocation0 [shape = 'u32[]', space=smem, size = 0x4, offset = 0x4, fixed_abs, tag = 'smem constant byte address 0x4 - core index']
  #allocation1 [shape = 'u32[144,128]{1,0:T(1,128)}', space=vmem, size = 0x12000, scoped, tag = 'internal scratch']
  %s0 = inlined_call_operand.vmem [shape: bf16[32,32], index: 0, kind: input, shape index: {}]
  %s1 = inlined_call_operand.vmem [shape: bf16[32,32], index: 1, kind: input, shape index: {}]
  %s2 = inlined_call_operand.vmem [shape: bf16[32,32], index: 2, kind: input, shape index: {}]
  %s3 = inlined_call_operand.vmem [shape: f32[32,16], index: 3, kind: input, shape index: {}]
  %s4 = inlined_call_operand.vmem [shape: f32[16,32], index: 4, kind: input, shape index: {}]
  %s5 = inlined_call_operand.vmem [shape: f32[1,32], index: 5, kind: input, shape index: {}]
  %s6 = inlined_call_operand.vmem [shape: bf16[32,128], index: 6, kind: input, shape index: {}]
  %s7 = inlined_call_operand.vmem [shape: f32[32,16], index: 7, kind: input, shape index: {}]
  %s8 = inlined_call_operand.vmem [shape: f32[1,16], index: 8, kind: input, shape index: {}]
  %s9 = inlined_call_operand.vmem [shape: bf16[32,128], index: 9, kind: output, shape index: {0}]
  %s10 = inlined_call_operand.vmem [shape: bf16[32,32], index: 10, kind: output, shape index: {1}]
  %s11 = inlined_call_operand.vmem [shape: f32[32,16], index: 11, kind: output, shape index: {2}]
  %12 = xla_tuple %s9, %s10, %s11
  %s13 = sld [smem:[#allocation0]]
  $region62: #{xey_transformer_layer.5} parent=0
    _
  %s15 = ssub.s32 1, %s13
  %s16 = scalar_select 0, %s15, %s13
  // Predicated region
  $region2: #{xey_transformer_layer.5} parent=0 // pred_check
    _
  $region3: #{xey_transformer_layer.5} parent=0 // pred_check_branch
    %18 = sbr.rel (0) target = $region5
  $region4: #{xey_transformer_layer.5} parent=0 // pred_region
    _
  $region5: #{xey_transformer_layer.5} parent=0 // pred_fallthru
    _
  // Predicated region
  $region6: #{xey_transformer_layer.5} parent=0 // pred_check
    _
  $region7: #{xey_transformer_layer.5} parent=0 // pred_check_branch
    %20 = sbr.rel (0) target = $region9
  $region8: #{xey_transformer_layer.5} parent=0 // pred_region
    _
  $region9: #{xey_transformer_layer.5} parent=0 // pred_fallthru
    _
  // Predicated region
  $region10: #{xey_transformer_layer.5} parent=0 // pred_check
    _
  $region11: #{xey_transformer_layer.5} parent=0 // pred_check_branch
    %22 = sbr.rel (0) target = $region13
  $region12: #{xey_transformer_layer.5} parent=0 // pred_region
    _
  $region13: #{xey_transformer_layer.5} parent=0 // pred_fallthru
    _
  // Predicated region
  $region14: #{xey_transformer_layer.5} parent=0 // pred_check
    _
  $region15: #{xey_transformer_layer.5} parent=0 // pred_check_branch
    %24 = sbr.rel (0) target = $region17
  $region16: #{xey_transformer_layer.5} parent=0 // pred_region
    _
  $region17: #{xey_transformer_layer.5} parent=0 // pred_fallthru
    _
  // Predicated region
  $region18: #{xey_transformer_layer.5} parent=0 // pred_check
    _
  $region19: #{xey_transformer_layer.5} parent=0 // pred_check_branch
    %26 = sbr.rel (0) target = $region21
  $region20: #{xey_transformer_layer.5} parent=0 // pred_region
    _
  $region21: #{xey_transformer_layer.5} parent=0 // pred_fallthru
    _
  // Predicated region
  $region22: #{xey_transformer_layer.5} parent=0 // pred_check
    _
  $region23: #{xey_transformer_layer.5} parent=0 // pred_check_branch
    %28 = sbr.rel (0) target = $region25
  $region24: #{xey_transformer_layer.5} parent=0 // pred_region
    _
  $region25: #{xey_transformer_layer.5} parent=0 // pred_fallthru
    _
  // Predicated region
  $region26: #{xey_transformer_layer.5} parent=0 // pred_check
    _
  $region27: #{xey_transformer_layer.5} parent=0 // pred_check_branch
    %30 = sbr.rel (0) target = $region29
  $region28: #{xey_transformer_layer.5} parent=0 // pred_region
    _
  $region29: #{xey_transformer_layer.5} parent=0 // pred_fallthru
    _
  // Predicated region
  $region30: #{xey_transformer_layer.5} parent=0 // pred_check
    _
  $region31: #{xey_transformer_layer.5} parent=0 // pred_check_branch
    %32 = sbr.rel (0) target = $region33
  $region32: #{xey_transformer_layer.5} parent=0 // pred_region
    _
  $region33: #{xey_transformer_layer.5} parent=0 // pred_fallthru
    _
  // Predicated region
  $region34: #{xey_transformer_layer.5} parent=0 // pred_check
    _
  $region35: #{xey_transformer_layer.5} parent=0 // pred_check_branch
    %34 = sbr.rel (0) target = $region37
  $region36: #{xey_transformer_layer.5} parent=0 // pred_region
    _
  $region37: #{xey_transformer_layer.5} parent=0 // pred_fallthru
    _
  %v36 = vld [vmem:[%s3] sm:$0xff]
  %v37 = vld [vmem:[%s3 + $0x8] sm:$0xff]
  %v38 = vld [vmem:[%s3 + $0x10] sm:$0xff]
  %v39 = vld [vmem:[%s3 + $0x18] sm:$0xff]
  %v40 = vpack.c.bf16 %v37, %v36
  %v41 = vpack.c.bf16 %v39, %v38
  %v42 = vld [vmem:[%s4] sm:$0xff]
  %v43 = vld [vmem:[%s4 + $0x8] sm:$0xff]
  %v44 = vpack.c.bf16 %v43, %v42
  %v45 = vld [vmem:[%s5] sm:$0x1]
  %v47 = vlaneseq
  %v48 = vshrl.u32 %v47, 7
  %v49 = vsub.s32 0, %v48
  %v50 = vrot.slane %v45, %v49
  %vm52 = vcmask 130048
  %v54 = vsel %vm52, %v40, 0
  %v57 = vsel %vm52, %v41, 0
  %59 = vmatprep.subr.bf16.mxu0 0
  %60 = vmatpush1.bf16.msra.mxu0 %v44
  %61 = vmatprep.subr.bf16.mxu0 0
  %62 = vmatpush1.bf16.msra.mxu0 0
  %63 = vmatprep.subr.bf16.mxu0 0
  %64 = vmatpush1.bf16.msra.mxu0 0
  %65 = vmatprep.subr.bf16.mxu0 0
  %66 = vmatpush1.bf16.msra.mxu0 0
  %67 = vmatprep.subr.bf16.mxu0 0
  %68 = vmatpush1.bf16.msra.mxu0 0
  %69 = vmatprep.subr.bf16.mxu0 0
  %70 = vmatpush1.bf16.msra.mxu0 0
  %71 = vmatprep.subr.bf16.mxu0 0
  %72 = vmatpush1.bf16.msra.mxu0 0
  %73 = vmatprep.subr.bf16.mxu0 0
  %74 = vmatpush1.bf16.msra.mxu0 0
  %75 = vmatprep.subr.bf16.mxu0 0
  %76 = vmatpush1.bf16.msra.mxu0 0
  %77 = vmatprep.subr.bf16.mxu0 0
  %78 = vmatpush1.bf16.msra.mxu0 0
  %79 = vmatprep.subr.bf16.mxu0 0
  %80 = vmatpush1.bf16.msra.mxu0 0
  %81 = vmatprep.subr.bf16.mxu0 0
  %82 = vmatpush1.bf16.msra.mxu0 0
  %83 = vmatprep.subr.bf16.mxu0 0
  %84 = vmatpush1.bf16.msra.mxu0 0
  %85 = vmatprep.subr.bf16.mxu0 0
  %86 = vmatpush1.bf16.msra.mxu0 0
  %87 = vmatprep.subr.bf16.mxu0 0
  %88 = vmatpush1.bf16.msra.mxu0 0
  %89 = vmatprep.subr.bf16.mxu0 0
  %90 = vmatpush1.bf16.msra.mxu0 0
  %91 = vmatprep.mubr.bf16.mxu0 0
  %92 = vmatmul.mubr.bf16.gmra.mrb[0].mxu0 %v54
  %v93 = vpop.f32.mrb[0].mxu0
  %v94 = vadd.f32 %v50, %v93
  %v95 = vpop.f32.mrb[0].mxu0
  %v96 = vpop.f32.mrb[0].mxu0
  %v97 = vadd.f32 %v50, %v96
  %v98 = vpop.f32.mrb[0].mxu0
  %99 = vmatprep.mubr.bf16.mxu0 0
  %100 = vmatmul.mubr.bf16.gmra.mrb[0].mxu0 %v57
  %v101 = vpop.f32.mrb[0].mxu0
  %v102 = vadd.f32 %v50, %v101
  %v103 = vpop.f32.mrb[0].mxu0
  %v104 = vpop.f32.mrb[0].mxu0
  %v105 = vadd.f32 %v50, %v104
  %v106 = vpop.f32.mrb[0].mxu0
  %107 = vdwg.mxu0
  %v108 = vld [vmem:[%s0] sm:$0xf]
  %v109 = vld [vmem:[%s0 + $0x4] sm:$0xf]
  %v110 = vld [vmem:[%s0 + $0x8] sm:$0xf]
  %v111 = vld [vmem:[%s0 + $0xc] sm:$0xf]
  %v112 = vunpack.c.l.bf16 %v108
  %v113 = vunpack.c.l.bf16 %v109
  %v114 = vunpack.c.l.bf16 %v110
  %v115 = vunpack.c.l.bf16 %v111
  %v116 = vld [vmem:[%s1] sm:$0xf]
  %v117 = vld [vmem:[%s1 + $0x4] sm:$0xf]
  %v118 = vld [vmem:[%s1 + $0x8] sm:$0xf]
  %v119 = vld [vmem:[%s1 + $0xc] sm:$0xf]
  %v120 = vunpack.c.l.bf16 %v116
  %v121 = vunpack.c.l.bf16 %v117
  %v122 = vunpack.c.l.bf16 %v118
  %v123 = vunpack.c.l.bf16 %v119
  %v124 = vadd.f32 %v120, %v94
  %v125 = vadd.f32 %v121, %v97
  %v126 = vadd.f32 %v122, %v102
  %v127 = vadd.f32 %v123, %v105
  %v128 = vmul.f32 %v112, %v124
  %v129 = vmul.f32 %v113, %v125
  %v130 = vmul.f32 %v114, %v126
  %v131 = vmul.f32 %v115, %v127
  %v132 = vpack.c.bf16 %v129, %v128
  %v133 = vpack.c.bf16 %v131, %v130
  %v134 = vld [vmem:[%s2] sm:$0xf]
  %v135 = vld [vmem:[%s2 + $0x4] sm:$0xf]
  %v136 = vld [vmem:[%s2 + $0x8] sm:$0xf]
  %v137 = vld [vmem:[%s2 + $0xc] sm:$0xf]
  %v138 = vunpack.c.l.bf16 %v134
  %v139 = vunpack.c.l.bf16 %v135
  %v140 = vunpack.c.l.bf16 %v136
  %v141 = vunpack.c.l.bf16 %v137
  %v142 = vadd.f32 %v138, %v94
  %v143 = vadd.f32 %v139, %v97
  %v144 = vadd.f32 %v140, %v102
  %v145 = vadd.f32 %v141, %v105
  %v146 = vpack.c.bf16 %v143, %v142
  %v147 = vpack.c.bf16 %v145, %v144
  %v150 = vunpack.c.l.b16 %v146
  %v151 = vunpack.c.h.b16 %v146
  %v152 = vunpack.c.l.b16 %v147
  %v153 = vunpack.c.h.b16 %v147
  %v154 = vpack.c.b16 %v150, %v150
  %v155 = vpack.c.b16 %v151, %v151
  %v156 = vpack.c.b16 %v152, %v152
  %v157 = vpack.c.b16 %v153, %v153
  %vm162 = vcmask 257024
  %163 = vst.msk [vmem:[%s10] sm:$0xf] %vm162, %v154
  %164 = vst.msk [vmem:[%s10 + $0x4] sm:$0xf] %vm162, %v155
  %165 = vst.msk [vmem:[%s10 + $0x8] sm:$0xf] %vm162, %v156
  %166 = vst.msk [vmem:[%s10 + $0xc] sm:$0xf] %vm162, %v157
  %v167 = vld [vmem:[%s6] sm:$0xf]
  %v168 = vld [vmem:[%s6 + $0x4] sm:$0xf]
  %v169 = vld [vmem:[%s6 + $0x8] sm:$0xf]
  %v170 = vld [vmem:[%s6 + $0xc] sm:$0xf]
  %v175 = vunpack.c.l.b16 %v167
  %v176 = vunpack.c.l.b16 %v168
  %v177 = vunpack.c.l.b16 %v169
  %v178 = vunpack.c.l.b16 %v170
  %v179 = vpack.c.b16 %v176, %v175
  %v180 = vpack.c.b16 %v178, %v177
  %vm183 = vcmask 261120
  %v185 = vsel %vm183, %v132, 0
  %v188 = vsel %vm183, %v133, 0
  %190 = vmatprep.subr.bf16.mxu0 0
  %191 = vmatpush1.bf16.msra.mxu0 %v179
  %192 = vmatprep.subr.bf16.mxu0 0
  %193 = vmatpush1.bf16.msra.mxu0 %v180
  %194 = vmatprep.subr.bf16.mxu0 0
  %195 = vmatpush1.bf16.msra.mxu0 0
  %196 = vmatprep.subr.bf16.mxu0 0
  %197 = vmatpush1.bf16.msra.mxu0 0
  %198 = vmatprep.subr.bf16.mxu0 0
  %199 = vmatpush1.bf16.msra.mxu0 0
  %200 = vmatprep.subr.bf16.mxu0 0
  %201 = vmatpush1.bf16.msra.mxu0 0
  %202 = vmatprep.subr.bf16.mxu0 0
  %203 = vmatpush1.bf16.msra.mxu0 0
  %204 = vmatprep.subr.bf16.mxu0 0
  %205 = vmatpush1.bf16.msra.mxu0 0
  %206 = vmatprep.subr.bf16.mxu0 0
  %207 = vmatpush1.bf16.msra.mxu0 0
  %208 = vmatprep.subr.bf16.mxu0 0
  %209 = vmatpush1.bf16.msra.mxu0 0
  %210 = vmatprep.subr.bf16.mxu0 0
  %211 = vmatpush1.bf16.msra.mxu0 0
  %212 = vmatprep.subr.bf16.mxu0 0
  %213 = vmatpush1.bf16.msra.mxu0 0
  %214 = vmatprep.subr.bf16.mxu0 0
  %215 = vmatpush1.bf16.msra.mxu0 0
  %216 = vmatprep.subr.bf16.mxu0 0
  %217 = vmatpush1.bf16.msra.mxu0 0
  %218 = vmatprep.subr.bf16.mxu0 0
  %219 = vmatpush1.bf16.msra.mxu0 0
  %220 = vmatprep.subr.bf16.mxu0 0
  %221 = vmatpush1.bf16.msra.mxu0 0
  %222 = vmatprep.mubr.bf16.mxu0 0
  %223 = vmatmul.mubr.bf16.gmra.mrb[0].mxu0 %v185
  %v224 = vpop.f32.mrb[0].mxu0
  %v225 = vadd.f32 0.0, %v224
  %v226 = vpop.f32.mrb[0].mxu0
  %v227 = vpop.f32.mrb[0].mxu0
  %v228 = vadd.f32 0.0, %v227
  %v229 = vpop.f32.mrb[0].mxu0
  %230 = vmatprep.mubr.bf16.mxu0 0
  %231 = vmatmul.mubr.bf16.gmra.mrb[0].mxu0 %v188
  %v232 = vpop.f32.mrb[0].mxu0
  %v233 = vadd.f32 0.0, %v232
  %v234 = vpop.f32.mrb[0].mxu0
  %v235 = vpop.f32.mrb[0].mxu0
  %v236 = vadd.f32 0.0, %v235
  %v237 = vpop.f32.mrb[0].mxu0
  %238 = vdwg.mxu0
  %v239 = vmul.f32 %v225, 0.35355338
  %v240 = vmul.f32 %v228, 0.35355338
  %v241 = vmul.f32 %v233, 0.35355338
  %v242 = vmul.f32 %v236, 0.35355338
  %v243 = vpack.c.bf16 %v240, %v239
  %v244 = vpack.c.bf16 %v242, %v241
  %v247 = vunpack.c.l.b16 %v243
  %v248 = vunpack.c.h.b16 %v243
  %v249 = vunpack.c.l.b16 %v244
  %v250 = vunpack.c.h.b16 %v244
  %v251 = vpack.c.b16 %v247, %v247
  %v252 = vpack.c.b16 %v248, %v248
  %v253 = vpack.c.b16 %v249, %v249
  %v254 = vpack.c.b16 %v250, %v250
  %259 = vst [vmem:[%s9] sm:$0xf] %v251
  %260 = vst [vmem:[%s9 + $0x4] sm:$0xf] %v252
  %261 = vst [vmem:[%s9 + $0x8] sm:$0xf] %v253
  %262 = vst [vmem:[%s9 + $0xc] sm:$0xf] %v254
  %v263 = vld [vmem:[%s7] sm:$0xff]
  %v264 = vld [vmem:[%s7 + $0x8] sm:$0xff]
  %v265 = vld [vmem:[%s7 + $0x10] sm:$0xff]
  %v266 = vld [vmem:[%s7 + $0x18] sm:$0xff]
  %v267 = vpack.c.bf16 %v264, %v263
  %v268 = vpack.c.bf16 %v266, %v265
  %v269 = vld [vmem:[%s8] sm:$0x1]
  %v271 = vlaneseq
  %v272 = vshrl.u32 %v271, 7
  %v273 = vsub.s32 0, %v272
  %v274 = vrot.slane %v269, %v273
  %276 = vmatprep.subr.bf16.mxu0 0
  %277 = vmatpush1.bf16.msra.mxu0 %v267
  %278 = vmatprep.subr.bf16.mxu0 0
  %279 = vmatpush1.bf16.msra.mxu0 %v268
  %280 = vmatprep.subr.bf16.mxu0 0
  %281 = vmatpush1.bf16.msra.mxu0 0
  %282 = vmatprep.subr.bf16.mxu0 0
  %283 = vmatpush1.bf16.msra.mxu0 0
  %284 = vmatprep.subr.bf16.mxu0 0
  %285 = vmatpush1.bf16.msra.mxu0 0
  %286 = vmatprep.subr.bf16.mxu0 0
  %287 = vmatpush1.bf16.msra.mxu0 0
  %288 = vmatprep.subr.bf16.mxu0 0
  %289 = vmatpush1.bf16.msra.mxu0 0
  %290 = vmatprep.subr.bf16.mxu0 0
  %291 = vmatpush1.bf16.msra.mxu0 0
  %292 = vmatprep.subr.bf16.mxu0 0
  %293 = vmatpush1.bf16.msra.mxu0 0
  %294 = vmatprep.subr.bf16.mxu0 0
  %295 = vmatpush1.bf16.msra.mxu0 0
  %296 = vmatprep.subr.bf16.mxu0 0
  %297 = vmatpush1.bf16.msra.mxu0 0
  %298 = vmatprep.subr.bf16.mxu0 0
  %299 = vmatpush1.bf16.msra.mxu0 0
  %300 = vmatprep.subr.bf16.mxu0 0
  %301 = vmatpush1.bf16.msra.mxu0 0
  %302 = vmatprep.subr.bf16.mxu0 0
  %303 = vmatpush1.bf16.msra.mxu0 0
  %304 = vmatprep.subr.bf16.mxu0 0
  %305 = vmatpush1.bf16.msra.mxu0 0
  %306 = vmatprep.subr.bf16.mxu0 0
  %307 = vmatpush1.bf16.msra.mxu0 0
  %308 = vmatprep.mubr.bf16.mxu0 0
  %309 = vmatmul.mubr.bf16.gmra.mrb[0].mxu0 %v185
  %v310 = vpop.f32.mrb[0].mxu0
  %v311 = vadd.f32 %v274, %v310
  %v312 = vpop.f32.mrb[0].mxu0
  %v313 = vpop.f32.mrb[0].mxu0
  %v314 = vadd.f32 %v274, %v313
  %v315 = vpop.f32.mrb[0].mxu0
  %316 = vmatprep.mubr.bf16.mxu0 0
  %317 = vmatmul.mubr.bf16.gmra.mrb[0].mxu0 %v188
  %v318 = vpop.f32.mrb[0].mxu0
  %v319 = vadd.f32 %v274, %v318
  %v320 = vpop.f32.mrb[0].mxu0
  %v321 = vpop.f32.mrb[0].mxu0
  %v322 = vadd.f32 %v274, %v321
  %v323 = vpop.f32.mrb[0].mxu0
  %324 = vdwg.mxu0
  %325 = vst.msk [vmem:[%s11] sm:$0xff] %vm52, %v311
  %326 = vst.msk [vmem:[%s11 + $0x8] sm:$0xff] %vm52, %v314
  %327 = vst.msk [vmem:[%s11 + $0x10] sm:$0xff] %vm52, %v319
  %328 = vst.msk [vmem:[%s11 + $0x18] sm:$0xff] %vm52, %v322
  // Predicated region
  $region38: #{xey_transformer_layer.5} parent=0 // pred_check
    _
  $region39: #{xey_transformer_layer.5} parent=0 // pred_check_branch
    %330 = sbr.rel (0) target = $region41
  $region40: #{xey_transformer_layer.5} parent=0 // pred_region
    _
  $region41: #{xey_transformer_layer.5} parent=0 // pred_fallthru
    _
  // Predicated region
  $region42: #{xey_transformer_layer.5} parent=0 // pred_check
    _
  $region43: #{xey_transformer_layer.5} parent=0 // pred_check_branch
    %332 = sbr.rel (0) target = $region45
  $region44: #{xey_transformer_layer.5} parent=0 // pred_region
    _
  $region45: #{xey_transformer_layer.5} parent=0 // pred_fallthru
    _
  // Predicated region
  $region46: #{xey_transformer_layer.5} parent=0 // pred_check
    _
  $region47: #{xey_transformer_layer.5} parent=0 // pred_check_branch
    %334 = sbr.rel (0) target = $region49
  $region48: #{xey_transformer_layer.5} parent=0 // pred_region
    _
  $region49: #{xey_transformer_layer.5} parent=0 // pred_fallthru
    _
  // Predicated region
  $region50: #{xey_transformer_layer.5} parent=0 // pred_check
    _
  $region51: #{xey_transformer_layer.5} parent=0 // pred_check_branch
    %336 = sbr.rel (0) target = $region53
  $region52: #{xey_transformer_layer.5} parent=0 // pred_region
    _
  $region53: #{xey_transformer_layer.5} parent=0 // pred_fallthru
    _
  // Predicated region
  $region54: #{xey_transformer_layer.5} parent=0 // pred_check
    _
  $region55: #{xey_transformer_layer.5} parent=0 // pred_check_branch
    %338 = sbr.rel (0) target = $region57
  $region56: #{xey_transformer_layer.5} parent=0 // pred_region
    _
  $region57: #{xey_transformer_layer.5} parent=0 // pred_fallthru
    _
  // Predicated region
  $region58: #{xey_transformer_layer.5} parent=0 // pred_check
    _
  $region59: #{xey_transformer_layer.5} parent=0 // pred_check_branch
    %340 = sbr.rel (0) target = $region61
  $region60: #{xey_transformer_layer.5} parent=0 // pred_region
    _
  $region61: #{xey_transformer_layer.5} parent=0 // pred_fallthru
    _

// kernel: xey_transformer_layer.7
$region0: #{xey_transformer_layer.7}
  #allocation0 [shape = 'u32[]', space=smem, size = 0x4, offset = 0x4, fixed_abs, tag = 'smem constant byte address 0x4 - core index']
  #allocation1 [shape = 'u32[144,128]{1,0:T(1,128)}', space=vmem, size = 0x12000, scoped, tag = 'internal scratch']
  %s0 = inlined_call_operand.vmem [shape: f32[32,16], index: 0, kind: input, shape index: {}]
  %s1 = inlined_call_operand.vmem [shape: f32[32,16], index: 1, kind: input, shape index: {}]
  %s2 = inlined_call_operand.vmem [shape: f32[1,16], index: 2, kind: input, shape index: {}]
  %s3 = inlined_call_operand.vmem [shape: f32[1,16], index: 3, kind: input, shape index: {}]
  %s4 = inlined_call_operand.vmem [shape: f32[16,32], index: 4, kind: input, shape index: {}]
  %s5 = inlined_call_operand.vmem [shape: f32[1,32], index: 5, kind: input, shape index: {}]
  %s6 = inlined_call_operand.vmem [shape: f32[32,16], index: 6, kind: input, shape index: {}]
  %s7 = inlined_call_operand.vmem [shape: f32[1,16], index: 7, kind: input, shape index: {}]
  %s8 = inlined_call_operand.vmem [shape: f32[1,16], index: 8, kind: input, shape index: {}]
  %s9 = inlined_call_operand.vmem [shape: f32[1,16], index: 9, kind: input, shape index: {}]
  %s10 = inlined_call_operand.vmem [shape: f32[32,16], index: 10, kind: output, shape index: {}]
  %s11 = sld [smem:[#allocation0]]
  $region50: #{xey_transformer_layer.7} parent=0
    _
  %s13 = ssub.s32 1, %s11
  %s14 = scalar_select 0, %s13, %s11
  // Predicated region
  $region2: #{xey_transformer_layer.7} parent=0 // pred_check
    _
  $region3: #{xey_transformer_layer.7} parent=0 // pred_check_branch
    %16 = sbr.rel (0) target = $region5
  $region4: #{xey_transformer_layer.7} parent=0 // pred_region
    _
  $region5: #{xey_transformer_layer.7} parent=0 // pred_fallthru
    _
  // Predicated region
  $region6: #{xey_transformer_layer.7} parent=0 // pred_check
    _
  $region7: #{xey_transformer_layer.7} parent=0 // pred_check_branch
    %18 = sbr.rel (0) target = $region9
  $region8: #{xey_transformer_layer.7} parent=0 // pred_region
    _
  $region9: #{xey_transformer_layer.7} parent=0 // pred_fallthru
    _
  // Predicated region
  $region10: #{xey_transformer_layer.7} parent=0 // pred_check
    _
  $region11: #{xey_transformer_layer.7} parent=0 // pred_check_branch
    %20 = sbr.rel (0) target = $region13
  $region12: #{xey_transformer_layer.7} parent=0 // pred_region
    _
  $region13: #{xey_transformer_layer.7} parent=0 // pred_fallthru
    _
  // Predicated region
  $region14: #{xey_transformer_layer.7} parent=0 // pred_check
    _
  $region15: #{xey_transformer_layer.7} parent=0 // pred_check_branch
    %22 = sbr.rel (0) target = $region17
  $region16: #{xey_transformer_layer.7} parent=0 // pred_region
    _
  $region17: #{xey_transformer_layer.7} parent=0 // pred_fallthru
    _
  // Predicated region
  $region18: #{xey_transformer_layer.7} parent=0 // pred_check
    _
  $region19: #{xey_transformer_layer.7} parent=0 // pred_check_branch
    %24 = sbr.rel (0) target = $region21
  $region20: #{xey_transformer_layer.7} parent=0 // pred_region
    _
  $region21: #{xey_transformer_layer.7} parent=0 // pred_fallthru
    _
  // Predicated region
  $region22: #{xey_transformer_layer.7} parent=0 // pred_check
    _
  $region23: #{xey_transformer_layer.7} parent=0 // pred_check_branch
    %26 = sbr.rel (0) target = $region25
  $region24: #{xey_transformer_layer.7} parent=0 // pred_region
    _
  $region25: #{xey_transformer_layer.7} parent=0 // pred_fallthru
    _
  // Predicated region
  $region26: #{xey_transformer_layer.7} parent=0 // pred_check
    _
  $region27: #{xey_transformer_layer.7} parent=0 // pred_check_branch
    %28 = sbr.rel (0) target = $region29
  $region28: #{xey_transformer_layer.7} parent=0 // pred_region
    _
  $region29: #{xey_transformer_layer.7} parent=0 // pred_fallthru
    _
  // Predicated region
  $region30: #{xey_transformer_layer.7} parent=0 // pred_check
    _
  $region31: #{xey_transformer_layer.7} parent=0 // pred_check_branch
    %30 = sbr.rel (0) target = $region33
  $region32: #{xey_transformer_layer.7} parent=0 // pred_region
    _
  $region33: #{xey_transformer_layer.7} parent=0 // pred_fallthru
    _
  // Predicated region
  $region34: #{xey_transformer_layer.7} parent=0 // pred_check
    _
  $region35: #{xey_transformer_layer.7} parent=0 // pred_check_branch
    %32 = sbr.rel (0) target = $region37
  $region36: #{xey_transformer_layer.7} parent=0 // pred_region
    _
  $region37: #{xey_transformer_layer.7} parent=0 // pred_fallthru
    _
  // Predicated region
  $region38: #{xey_transformer_layer.7} parent=0 // pred_check
    _
  $region39: #{xey_transformer_layer.7} parent=0 // pred_check_branch
    %34 = sbr.rel (0) target = $region41
  $region40: #{xey_transformer_layer.7} parent=0 // pred_region
    _
  $region41: #{xey_transformer_layer.7} parent=0 // pred_fallthru
    _
  %v36 = vld [vmem:[%s1] sm:$0xff]
  %v37 = vld [vmem:[%s1 + $0x8] sm:$0xff]
  %v38 = vld [vmem:[%s1 + $0x10] sm:$0xff]
  %v39 = vld [vmem:[%s1 + $0x18] sm:$0xff]
  %v40 = vld [vmem:[%s0] sm:$0xff]
  %v41 = vld [vmem:[%s0 + $0x8] sm:$0xff]
  %v42 = vld [vmem:[%s0 + $0x10] sm:$0xff]
  %v43 = vld [vmem:[%s0 + $0x18] sm:$0xff]
  %v44 = vadd.f32 %v36, %v40
  %v45 = vadd.f32 %v37, %v41
  %v46 = vadd.f32 %v38, %v42
  %v47 = vadd.f32 %v39, %v43
  %v48 = vld [vmem:[%s2] sm:$0x1]
  %v49 = vld [vmem:[%s3] sm:$0x1]
  %vm50 = vcmask 130048
  %v51 = vsel %vm50, %v44, 0.0
  %52 = vadd.xlane.f32.xlu0 %v51
  %v53 = vpop.xlane.xlu0 %52
  %v54 = vsel %vm50, %v45, 0.0
  %55 = vadd.xlane.f32.xlu0 %v54
  %v56 = vpop.xlane.xlu0 %55
  %v57 = vsel %vm50, %v46, 0.0
  %58 = vadd.xlane.f32.xlu0 %v57
  %v59 = vpop.xlane.xlu0 %58
  %v60 = vsel %vm50, %v47, 0.0
  %61 = vadd.xlane.f32.xlu0 %v60
  %v62 = vpop.xlane.xlu0 %61
  %v63 = vrcp.pop 16.0
  %v64 = vmul.f32 %v53, %v63
  %v65 = vmul.f32 %v56, %v63
  %v66 = vmul.f32 %v59, %v63
  %v67 = vmul.f32 %v62, %v63
  %v68 = vsub.f32 %v44, %v64
  %v69 = vsub.f32 %v45, %v65
  %v70 = vsub.f32 %v46, %v66
  %v71 = vsub.f32 %v47, %v67
  %v72 = vmul.f32 %v68, %v68
  %v73 = vmul.f32 %v69, %v69
  %v74 = vmul.f32 %v70, %v70
  %v75 = vmul.f32 %v71, %v71
  %v76 = vsel %vm50, %v72, 0.0
  %77 = vadd.xlane.f32.xlu0 %v76
  %v78 = vpop.xlane.xlu0 %77
  %v79 = vsel %vm50, %v73, 0.0
  %80 = vadd.xlane.f32.xlu0 %v79
  %v81 = vpop.xlane.xlu0 %80
  %v82 = vsel %vm50, %v74, 0.0
  %83 = vadd.xlane.f32.xlu0 %v82
  %v84 = vpop.xlane.xlu0 %83
  %v85 = vsel %vm50, %v75, 0.0
  %86 = vadd.xlane.f32.xlu0 %v85
  %v87 = vpop.xlane.xlu0 %86
  %v88 = vmul.f32 %v78, %v63
  %v89 = vmul.f32 %v81, %v63
  %v90 = vmul.f32 %v84, %v63
  %v91 = vmul.f32 %v87, %v63
  %v92 = vadd.f32 %v88, 1e-05
  %v93 = vadd.f32 %v89, 1e-05
  %v94 = vadd.f32 %v90, 1e-05
  %v95 = vadd.f32 %v91, 1e-05
  %v96 = vrsqrt.pop %v92
  %v97 = vrsqrt.pop %v93
  %v98 = vrsqrt.pop %v94
  %v99 = vrsqrt.pop %v95
  %v100 = vmul.f32 %v68, %v96
  %v101 = vmul.f32 %v69, %v97
  %v102 = vmul.f32 %v70, %v98
  %v103 = vmul.f32 %v71, %v99
  %v105 = vlaneseq
  %v106 = vshrl.u32 %v105, 7
  %v107 = vsub.s32 0, %v106
  %v108 = vrot.slane %v48, %v107
  %v110 = vmul.f32 %v100, %v108
  %v111 = vmul.f32 %v101, %v108
  %v112 = vmul.f32 %v102, %v108
  %v113 = vmul.f32 %v103, %v108
  %v115 = vlaneseq
  %v116 = vshrl.u32 %v115, 7
  %v117 = vsub.s32 0, %v116
  %v118 = vrot.slane %v49, %v117
  %v120 = vadd.f32 %v110, %v118
  %v121 = vadd.f32 %v111, %v118
  %v122 = vadd.f32 %v112, %v118
  %v123 = vadd.f32 %v113, %v118
  %v124 = vpack.c.bf16 %v121, %v120
  %v125 = vpack.c.bf16 %v123, %v122
  %v126 = vld [vmem:[%s4] sm:$0xff]
  %v127 = vld [vmem:[%s4 + $0x8] sm:$0xff]
  %v128 = vpack.c.bf16 %v127, %v126
  %v129 = vld [vmem:[%s5] sm:$0x1]
  %v131 = vlaneseq
  %v132 = vshrl.u32 %v131, 7
  %v133 = vsub.s32 0, %v132
  %v134 = vrot.slane %v129, %v133
  %v137 = vsel %vm50, %v124, 0
  %v140 = vsel %vm50, %v125, 0
  %142 = vmatprep.subr.bf16.mxu0 0
  %143 = vmatpush1.bf16.msra.mxu0 %v128
  %144 = vmatprep.subr.bf16.mxu0 0
  %145 = vmatpush1.bf16.msra.mxu0 0
  %146 = vmatprep.subr.bf16.mxu0 0
  %147 = vmatpush1.bf16.msra.mxu0 0
  %148 = vmatprep.subr.bf16.mxu0 0
  %149 = vmatpush1.bf16.msra.mxu0 0
  %150 = vmatprep.subr.bf16.mxu0 0
  %151 = vmatpush1.bf16.msra.mxu0 0
  %152 = vmatprep.subr.bf16.mxu0 0
  %153 = vmatpush1.bf16.msra.mxu0 0
  %154 = vmatprep.subr.bf16.mxu0 0
  %155 = vmatpush1.bf16.msra.mxu0 0
  %156 = vmatprep.subr.bf16.mxu0 0
  %157 = vmatpush1.bf16.msra.mxu0 0
  %158 = vmatprep.subr.bf16.mxu0 0
  %159 = vmatpush1.bf16.msra.mxu0 0
  %160 = vmatprep.subr.bf16.mxu0 0
  %161 = vmatpush1.bf16.msra.mxu0 0
  %162 = vmatprep.subr.bf16.mxu0 0
  %163 = vmatpush1.bf16.msra.mxu0 0
  %164 = vmatprep.subr.bf16.mxu0 0
  %165 = vmatpush1.bf16.msra.mxu0 0
  %166 = vmatprep.subr.bf16.mxu0 0
  %167 = vmatpush1.bf16.msra.mxu0 0
  %168 = vmatprep.subr.bf16.mxu0 0
  %169 = vmatpush1.bf16.msra.mxu0 0
  %170 = vmatprep.subr.bf16.mxu0 0
  %171 = vmatpush1.bf16.msra.mxu0 0
  %172 = vmatprep.subr.bf16.mxu0 0
  %173 = vmatpush1.bf16.msra.mxu0 0
  %174 = vmatprep.mubr.bf16.mxu0 0
  %175 = vmatmul.mubr.bf16.gmra.mrb[0].mxu0 %v137
  %v176 = vpop.f32.mrb[0].mxu0
  %v177 = vadd.f32 %v134, %v176
  %v178 = vpop.f32.mrb[0].mxu0
  %v179 = vpop.f32.mrb[0].mxu0
  %v180 = vadd.f32 %v134, %v179
  %v181 = vpop.f32.mrb[0].mxu0
  %182 = vmatprep.mubr.bf16.mxu0 0
  %183 = vmatmul.mubr.bf16.gmra.mrb[0].mxu0 %v140
  %v184 = vpop.f32.mrb[0].mxu0
  %v185 = vadd.f32 %v134, %v184
  %v186 = vpop.f32.mrb[0].mxu0
  %v187 = vpop.f32.mrb[0].mxu0
  %v188 = vadd.f32 %v134, %v187
  %v189 = vpop.f32.mrb[0].mxu0
  %190 = vdwg.mxu0
  %v191 = vmax.f32 %v177, 0.0
  %v192 = vmax.f32 %v180, 0.0
  %v193 = vmax.f32 %v185, 0.0
  %v194 = vmax.f32 %v188, 0.0
  %v195 = vpack.c.bf16 %v192, %v191
  %v196 = vpack.c.bf16 %v194, %v193
  %v197 = vld [vmem:[%s6] sm:$0xff]
  %v198 = vld [vmem:[%s6 + $0x8] sm:$0xff]
  %v199 = vld [vmem:[%s6 + $0x10] sm:$0xff]
  %v200 = vld [vmem:[%s6 + $0x18] sm:$0xff]
  %v201 = vpack.c.bf16 %v198, %v197
  %v202 = vpack.c.bf16 %v200, %v199
  %v203 = vld [vmem:[%s7] sm:$0x1]
  %v205 = vlaneseq
  %v206 = vshrl.u32 %v205, 7
  %v207 = vsub.s32 0, %v206
  %v208 = vrot.slane %v203, %v207
  %vm210 = vcmask 261120
  %v212 = vsel %vm210, %v195, 0
  %v215 = vsel %vm210, %v196, 0
  %217 = vmatprep.subr.bf16.mxu0 0
  %218 = vmatpush1.bf16.msra.mxu0 %v201
  %219 = vmatprep.subr.bf16.mxu0 0
  %220 = vmatpush1.bf16.msra.mxu0 %v202
  %221 = vmatprep.subr.bf16.mxu0 0
  %222 = vmatpush1.bf16.msra.mxu0 0
  %223 = vmatprep.subr.bf16.mxu0 0
  %224 = vmatpush1.bf16.msra.mxu0 0
  %225 = vmatprep.subr.bf16.mxu0 0
  %226 = vmatpush1.bf16.msra.mxu0 0
  %227 = vmatprep.subr.bf16.mxu0 0
  %228 = vmatpush1.bf16.msra.mxu0 0
  %229 = vmatprep.subr.bf16.mxu0 0
  %230 = vmatpush1.bf16.msra.mxu0 0
  %231 = vmatprep.subr.bf16.mxu0 0
  %232 = vmatpush1.bf16.msra.mxu0 0
  %233 = vmatprep.subr.bf16.mxu0 0
  %234 = vmatpush1.bf16.msra.mxu0 0
  %235 = vmatprep.subr.bf16.mxu0 0
  %236 = vmatpush1.bf16.msra.mxu0 0
  %237 = vmatprep.subr.bf16.mxu0 0
  %238 = vmatpush1.bf16.msra.mxu0 0
  %239 = vmatprep.subr.bf16.mxu0 0
  %240 = vmatpush1.bf16.msra.mxu0 0
  %241 = vmatprep.subr.bf16.mxu0 0
  %242 = vmatpush1.bf16.msra.mxu0 0
  %243 = vmatprep.subr.bf16.mxu0 0
  %244 = vmatpush1.bf16.msra.mxu0 0
  %245 = vmatprep.subr.bf16.mxu0 0
  %246 = vmatpush1.bf16.msra.mxu0 0
  %247 = vmatprep.subr.bf16.mxu0 0
  %248 = vmatpush1.bf16.msra.mxu0 0
  %249 = vmatprep.mubr.bf16.mxu0 0
  %250 = vmatmul.mubr.bf16.gmra.mrb[0].mxu0 %v212
  %v251 = vpop.f32.mrb[0].mxu0
  %v252 = vadd.f32 %v208, %v251
  %v253 = vpop.f32.mrb[0].mxu0
  %v254 = vpop.f32.mrb[0].mxu0
  %v255 = vadd.f32 %v208, %v254
  %v256 = vpop.f32.mrb[0].mxu0
  %257 = vmatprep.mubr.bf16.mxu0 0
  %258 = vmatmul.mubr.bf16.gmra.mrb[0].mxu0 %v215
  %v259 = vpop.f32.mrb[0].mxu0
  %v260 = vadd.f32 %v208, %v259
  %v261 = vpop.f32.mrb[0].mxu0
  %v262 = vpop.f32.mrb[0].mxu0
  %v263 = vadd.f32 %v208, %v262
  %v264 = vpop.f32.mrb[0].mxu0
  %265 = vdwg.mxu0
  %v266 = vadd.f32 %v120, %v252
  %v267 = vadd.f32 %v121, %v255
  %v268 = vadd.f32 %v122, %v260
  %v269 = vadd.f32 %v123, %v263
  %v270 = vld [vmem:[%s8] sm:$0x1]
  %v271 = vld [vmem:[%s9] sm:$0x1]
  %v272 = vsel %vm50, %v266, 0.0
  %273 = vadd.xlane.f32.xlu0 %v272
  %v274 = vpop.xlane.xlu0 %273
  %v275 = vsel %vm50, %v267, 0.0
  %276 = vadd.xlane.f32.xlu0 %v275
  %v277 = vpop.xlane.xlu0 %276
  %v278 = vsel %vm50, %v268, 0.0
  %279 = vadd.xlane.f32.xlu0 %v278
  %v280 = vpop.xlane.xlu0 %279
  %v281 = vsel %vm50, %v269, 0.0
  %282 = vadd.xlane.f32.xlu0 %v281
  %v283 = vpop.xlane.xlu0 %282
  %v284 = vmul.f32 %v274, %v63
  %v285 = vmul.f32 %v277, %v63
  %v286 = vmul.f32 %v280, %v63
  %v287 = vmul.f32 %v283, %v63
  %v288 = vsub.f32 %v266, %v284
  %v289 = vsub.f32 %v267, %v285
  %v290 = vsub.f32 %v268, %v286
  %v291 = vsub.f32 %v269, %v287
  %v292 = vmul.f32 %v288, %v288
  %v293 = vmul.f32 %v289, %v289
  %v294 = vmul.f32 %v290, %v290
  %v295 = vmul.f32 %v291, %v291
  %v296 = vsel %vm50, %v292, 0.0
  %297 = vadd.xlane.f32.xlu0 %v296
  %v298 = vpop.xlane.xlu0 %297
  %v299 = vsel %vm50, %v293, 0.0
  %300 = vadd.xlane.f32.xlu0 %v299
  %v301 = vpop.xlane.xlu0 %300
  %v302 = vsel %vm50, %v294, 0.0
  %303 = vadd.xlane.f32.xlu0 %v302
  %v304 = vpop.xlane.xlu0 %303
  %v305 = vsel %vm50, %v295, 0.0
  %306 = vadd.xlane.f32.xlu0 %v305
  %v307 = vpop.xlane.xlu0 %306
  %v308 = vmul.f32 %v298, %v63
  %v309 = vmul.f32 %v301, %v63
  %v310 = vmul.f32 %v304, %v63
  %v311 = vmul.f32 %v307, %v63
  %v312 = vadd.f32 %v308, 1e-05
  %v313 = vadd.f32 %v309, 1e-05
  %v314 = vadd.f32 %v310, 1e-05
  %v315 = vadd.f32 %v311, 1e-05
  %v316 = vrsqrt.pop %v312
  %v317 = vrsqrt.pop %v313
  %v318 = vrsqrt.pop %v314
  %v319 = vrsqrt.pop %v315
  %v320 = vmul.f32 %v288, %v316
  %v321 = vmul.f32 %v289, %v317
  %v322 = vmul.f32 %v290, %v318
  %v323 = vmul.f32 %v291, %v319
  %v325 = vlaneseq
  %v326 = vshrl.u32 %v325, 7
  %v327 = vsub.s32 0, %v326
  %v328 = vrot.slane %v270, %v327
  %v330 = vmul.f32 %v320, %v328
  %v331 = vmul.f32 %v321, %v328
  %v332 = vmul.f32 %v322, %v328
  %v333 = vmul.f32 %v323, %v328
  %v335 = vlaneseq
  %v336 = vshrl.u32 %v335, 7
  %v337 = vsub.s32 0, %v336
  %v338 = vrot.slane %v271, %v337
  %v340 = vadd.f32 %v330, %v338
  %v341 = vadd.f32 %v331, %v338
  %v342 = vadd.f32 %v332, %v338
  %v343 = vadd.f32 %v333, %v338
  %344 = vst.msk [vmem:[%s10] sm:$0xff] %vm50, %v340
  %345 = vst.msk [vmem:[%s10 + $0x8] sm:$0xff] %vm50, %v341
  %346 = vst.msk [vmem:[%s10 + $0x10] sm:$0xff] %vm50, %v342
  %347 = vst.msk [vmem:[%s10 + $0x18] sm:$0xff] %vm50, %v343
  // Predicated region
  $region42: #{xey_transformer_layer.7} parent=0 // pred_check
    _
  $region43: #{xey_transformer_layer.7} parent=0 // pred_check_branch
    %349 = sbr.rel (0) target = $region45
  $region44: #{xey_transformer_layer.7} parent=0 // pred_region
    _
  $region45: #{xey_transformer_layer.7} parent=0 // pred_fallthru
    _
  // Predicated region
  $region46: #{xey_transformer_layer.7} parent=0 // pred_check
    _
  $region47: #{xey_transformer_layer.7} parent=0 // pred_check_branch
    %351 = sbr.rel (0) target = $region49
  $region48: #{xey_transformer_layer.7} parent=0 // pred_region
    _
  $region49: #{xey_transformer_layer.7} parent=0 // pred_fallthru
    _

// kernel: xey_transformer_layer.6
$region0: #{xey_transformer_layer.6}
  #allocation0 [shape = 'u32[]', space=smem, size = 0x4, offset = 0x4, fixed_abs, tag = 'smem constant byte address 0x4 - core index']
  #allocation1 [shape = 'u32[144,128]{1,0:T(1,128)}', space=vmem, size = 0x12000, scoped, tag = 'internal scratch']
  %s0 = inlined_call_operand.vmem [shape: f32[16,32], index: 0, kind: input, shape index: {}]
  %s1 = inlined_call_operand.vmem [shape: f32[16,32], index: 1, kind: input, shape index: {}]
  %s2 = inlined_call_operand.vmem [shape: f32[32,32], index: 2, kind: input, shape index: {}]
  %s3 = inlined_call_operand.vmem [shape: f32[1,32], index: 3, kind: input, shape index: {}]
  %s4 = inlined_call_operand.vmem [shape: f32[1,32], index: 4, kind: input, shape index: {}]
  %s5 = inlined_call_operand.vmem [shape: f32[1,32], index: 5, kind: input, shape index: {}]
  %s6 = inlined_call_operand.vmem [shape: f32[32,64], index: 6, kind: input, shape index: {}]
  %s7 = inlined_call_operand.vmem [shape: f32[1,64], index: 7, kind: input, shape index: {}]
  %s8 = inlined_call_operand.vmem [shape: f32[64,32], index: 8, kind: input, shape index: {}]
  %s9 = inlined_call_operand.vmem [shape: f32[1,32], index: 9, kind: input, shape index: {}]
  %s10 = inlined_call_operand.vmem [shape: f32[1,32], index: 10, kind: input, shape index: {}]
  %s11 = inlined_call_operand.vmem [shape: f32[1,32], index: 11, kind: input, shape index: {}]
  %s12 = inlined_call_operand.hbm [shape: f32[16,32], index: 12, kind: output, shape index: {}]
  %s13 = sld [smem:[#allocation0]]
  $region58: #{xey_transformer_layer.6} parent=0
    _
  %s15 = ssub.s32 1, %s13
  %s16 = scalar_select 0, %s15, %s13
  $region1: #{xey_transformer_layer.6} parent=0
    #allocation2 [shape = 'u8[8192]{0}', space=vmem, size = 0x2000, scoped, tag = 'output window, operand 0, single buffered']
    #allocation3 [shape = 's32[1]{0}', space=sflag, size = 0x4, scoped, tag = 'scoped memory for xey_transformer_layer.6']
    %17 = vsyncpa [#allocation3], 0
    // Predicated region
    $region2: #{xey_transformer_layer.6} parent=1 // pred_check
      _
    $region3: #{xey_transformer_layer.6} parent=1 // pred_check_branch
      %19 = sbr.rel (0) target = $region5
    $region4: #{xey_transformer_layer.6} parent=1 // pred_region
      _
    $region5: #{xey_transformer_layer.6} parent=1 // pred_fallthru
      _
    // Predicated region
    $region6: #{xey_transformer_layer.6} parent=1 // pred_check
      _
    $region7: #{xey_transformer_layer.6} parent=1 // pred_check_branch
      %21 = sbr.rel (0) target = $region9
    $region8: #{xey_transformer_layer.6} parent=1 // pred_region
      _
    $region9: #{xey_transformer_layer.6} parent=1 // pred_fallthru
      _
    // Predicated region
    $region10: #{xey_transformer_layer.6} parent=1 // pred_check
      _
    $region11: #{xey_transformer_layer.6} parent=1 // pred_check_branch
      %23 = sbr.rel (0) target = $region13
    $region12: #{xey_transformer_layer.6} parent=1 // pred_region
      _
    $region13: #{xey_transformer_layer.6} parent=1 // pred_fallthru
      _
    // Predicated region
    $region14: #{xey_transformer_layer.6} parent=1 // pred_check
      _
    $region15: #{xey_transformer_layer.6} parent=1 // pred_check_branch
      %25 = sbr.rel (0) target = $region17
    $region16: #{xey_transformer_layer.6} parent=1 // pred_region
      _
    $region17: #{xey_transformer_layer.6} parent=1 // pred_fallthru
      _
    // Predicated region
    $region18: #{xey_transformer_layer.6} parent=1 // pred_check
      _
    $region19: #{xey_transformer_layer.6} parent=1 // pred_check_branch
      %27 = sbr.rel (0) target = $region21
    $region20: #{xey_transformer_layer.6} parent=1 // pred_region
      _
    $region21: #{xey_transformer_layer.6} parent=1 // pred_fallthru
      _
    // Predicated region
    $region22: #{xey_transformer_layer.6} parent=1 // pred_check
      _
    $region23: #{xey_transformer_layer.6} parent=1 // pred_check_branch
      %29 = sbr.rel (0) target = $region25
    $region24: #{xey_transformer_layer.6} parent=1 // pred_region
      _
    $region25: #{xey_transformer_layer.6} parent=1 // pred_fallthru
      _
    // Predicated region
    $region26: #{xey_transformer_layer.6} parent=1 // pred_check
      _
    $region27: #{xey_transformer_layer.6} parent=1 // pred_check_branch
      %31 = sbr.rel (0) target = $region29
    $region28: #{xey_transformer_layer.6} parent=1 // pred_region
      _
    $region29: #{xey_transformer_layer.6} parent=1 // pred_fallthru
      _
    // Predicated region
    $region30: #{xey_transformer_layer.6} parent=1 // pred_check
      _
    $region31: #{xey_transformer_layer.6} parent=1 // pred_check_branch
      %33 = sbr.rel (0) target = $region33
    $region32: #{xey_transformer_layer.6} parent=1 // pred_region
      _
    $region33: #{xey_transformer_layer.6} parent=1 // pred_fallthru
      _
    // Predicated region
    $region34: #{xey_transformer_layer.6} parent=1 // pred_check
      _
    $region35: #{xey_transformer_layer.6} parent=1 // pred_check_branch
      %35 = sbr.rel (0) target = $region37
    $region36: #{xey_transformer_layer.6} parent=1 // pred_region
      _
    $region37: #{xey_transformer_layer.6} parent=1 // pred_fallthru
      _
    // Predicated region
    $region38: #{xey_transformer_layer.6} parent=1 // pred_check
      _
    $region39: #{xey_transformer_layer.6} parent=1 // pred_check_branch
      %37 = sbr.rel (0) target = $region41
    $region40: #{xey_transformer_layer.6} parent=1 // pred_region
      _
    $region41: #{xey_transformer_layer.6} parent=1 // pred_fallthru
      _
    // Predicated region
    $region42: #{xey_transformer_layer.6} parent=1 // pred_check
      _
    $region43: #{xey_transformer_layer.6} parent=1 // pred_check_branch
      %39 = sbr.rel (0) target = $region45
    $region44: #{xey_transformer_layer.6} parent=1 // pred_region
      _
    $region45: #{xey_transformer_layer.6} parent=1 // pred_fallthru
      _
    // Predicated region
    $region46: #{xey_transformer_layer.6} parent=1 // pred_check
      _
    $region47: #{xey_transformer_layer.6} parent=1 // pred_check_branch
      %41 = sbr.rel (0) target = $region49
    $region48: #{xey_transformer_layer.6} parent=1 // pred_region
      _
    $region49: #{xey_transformer_layer.6} parent=1 // pred_fallthru
      _
    %v43 = vld [vmem:[%s0] sm:$0xff]
    %v44 = vld [vmem:[%s0 + $0x8] sm:$0xff]
    %v45 = vpack.c.bf16 %v44, %v43
    %v46 = vld [vmem:[%s2] sm:$0xff]
    %v47 = vld [vmem:[%s2 + $0x8] sm:$0xff]
    %v48 = vld [vmem:[%s2 + $0x10] sm:$0xff]
    %v49 = vld [vmem:[%s2 + $0x18] sm:$0xff]
    %v50 = vpack.c.bf16 %v47, %v46
    %v51 = vpack.c.bf16 %v49, %v48
    %v52 = vld [vmem:[%s3] sm:$0x1]
    %v54 = vlaneseq
    %v55 = vshrl.u32 %v54, 7
    %v56 = vsub.s32 0, %v55
    %v57 = vrot.slane %v52, %v56
    %vm59 = vcmask 261120
    %v61 = vsel %vm59, %v45, 0
    %63 = vmatprep.subr.bf16.mxu0 0
    %64 = vmatpush1.bf16.msra.mxu0 %v50
    %65 = vmatprep.subr.bf16.mxu0 0
    %66 = vmatpush1.bf16.msra.mxu0 %v51
    %67 = vmatprep.subr.bf16.mxu0 0
    %68 = vmatpush1.bf16.msra.mxu0 0
    %69 = vmatprep.subr.bf16.mxu0 0
    %70 = vmatpush1.bf16.msra.mxu0 0
    %71 = vmatprep.subr.bf16.mxu0 0
    %72 = vmatpush1.bf16.msra.mxu0 0
    %73 = vmatprep.subr.bf16.mxu0 0
    %74 = vmatpush1.bf16.msra.mxu0 0
    %75 = vmatprep.subr.bf16.mxu0 0
    %76 = vmatpush1.bf16.msra.mxu0 0
    %77 = vmatprep.subr.bf16.mxu0 0
    %78 = vmatpush1.bf16.msra.mxu0 0
    %79 = vmatprep.subr.bf16.mxu0 0
    %80 = vmatpush1.bf16.msra.mxu0 0
    %81 = vmatprep.subr.bf16.mxu0 0
    %82 = vmatpush1.bf16.msra.mxu0 0
    %83 = vmatprep.subr.bf16.mxu0 0
    %84 = vmatpush1.bf16.msra.mxu0 0
    %85 = vmatprep.subr.bf16.mxu0 0
    %86 = vmatpush1.bf16.msra.mxu0 0
    %87 = vmatprep.subr.bf16.mxu0 0
    %88 = vmatpush1.bf16.msra.mxu0 0
    %89 = vmatprep.subr.bf16.mxu0 0
    %90 = vmatpush1.bf16.msra.mxu0 0
    %91 = vmatprep.subr.bf16.mxu0 0
    %92 = vmatpush1.bf16.msra.mxu0 0
    %93 = vmatprep.subr.bf16.mxu0 0
    %94 = vmatpush1.bf16.msra.mxu0 0
    %95 = vmatprep.mubr.bf16.mxu0 0
    %96 = vmatmul.mubr.bf16.gmra.mrb[0].mxu0 %v61
    %v97 = vpop.f32.mrb[0].mxu0
    %v98 = vadd.f32 %v57, %v97
    %v99 = vpop.f32.mrb[0].mxu0
    %v100 = vpop.f32.mrb[0].mxu0
    %v101 = vadd.f32 %v57, %v100
    %v102 = vpop.f32.mrb[0].mxu0
    %103 = vdwg.mxu0
    %v104 = vld [vmem:[%s1] sm:$0xff]
    %v105 = vld [vmem:[%s1 + $0x8] sm:$0xff]
    %v106 = vadd.f32 %v104, %v98
    %v107 = vadd.f32 %v105, %v101
    %v108 = vld [vmem:[%s4] sm:$0x1]
    %v109 = vld [vmem:[%s5] sm:$0x1]
    %v110 = vsel %vm59, %v106, 0.0
    %111 = vadd.xlane.f32.xlu0 %v110
    %v112 = vpop.xlane.xlu0 %111
    %v113 = vsel %vm59, %v107, 0.0
    %114 = vadd.xlane.f32.xlu0 %v113
    %v115 = vpop.xlane.xlu0 %114
    %v116 = vrcp.pop 32.0
    %v117 = vmul.f32 %v112, %v116
    %v118 = vmul.f32 %v115, %v116
    %v119 = vsub.f32 %v106, %v117
    %v120 = vsub.f32 %v107, %v118
    %v121 = vmul.f32 %v119, %v119
    %v122 = vmul.f32 %v120, %v120
    %v123 = vsel %vm59, %v121, 0.0
    %124 = vadd.xlane.f32.xlu0 %v123
    %v125 = vpop.xlane.xlu0 %124
    %v126 = vsel %vm59, %v122, 0.0
    %127 = vadd.xlane.f32.xlu0 %v126
    %v128 = vpop.xlane.xlu0 %127
    %v129 = vmul.f32 %v125, %v116
    %v130 = vmul.f32 %v128, %v116
    %v131 = vadd.f32 %v129, 1e-05
    %v132 = vadd.f32 %v130, 1e-05
    %v133 = vrsqrt.pop %v131
    %v134 = vrsqrt.pop %v132
    %v135 = vmul.f32 %v119, %v133
    %v136 = vmul.f32 %v120, %v134
    %v138 = vlaneseq
    %v139 = vshrl.u32 %v138, 7
    %v140 = vsub.s32 0, %v139
    %v141 = vrot.slane %v108, %v140
    %v143 = vmul.f32 %v135, %v141
    %v144 = vmul.f32 %v136, %v141
    %v146 = vlaneseq
    %v147 = vshrl.u32 %v146, 7
    %v148 = vsub.s32 0, %v147
    %v149 = vrot.slane %v109, %v148
    %v151 = vadd.f32 %v143, %v149
    %v152 = vadd.f32 %v144, %v149
    %v153 = vpack.c.bf16 %v152, %v151
    %v154 = vld [vmem:[%s6] sm:$0xff]
    %v155 = vld [vmem:[%s6 + $0x8] sm:$0xff]
    %v156 = vld [vmem:[%s6 + $0x10] sm:$0xff]
    %v157 = vld [vmem:[%s6 + $0x18] sm:$0xff]
    %v158 = vpack.c.bf16 %v155, %v154
    %v159 = vpack.c.bf16 %v157, %v156
    %v160 = vld [vmem:[%s7] sm:$0x1]
    %v162 = vlaneseq
    %v163 = vshrl.u32 %v162, 7
    %v164 = vsub.s32 0, %v163
    %v165 = vrot.slane %v160, %v164
    %v168 = vsel %vm59, %v153, 0
    %170 = vmatprep.subr.bf16.mxu0 0
    %171 = vmatpush1.bf16.msra.mxu0 %v158
    %172 = vmatprep.subr.bf16.mxu0 0
    %173 = vmatpush1.bf16.msra.mxu0 %v159
    %174 = vmatprep.subr.bf16.mxu0 0
    %175 = vmatpush1.bf16.msra.mxu0 0
    %176 = vmatprep.subr.bf16.mxu0 0
    %177 = vmatpush1.bf16.msra.mxu0 0
    %178 = vmatprep.subr.bf16.mxu0 0
    %179 = vmatpush1.bf16.msra.mxu0 0
    %180 = vmatprep.subr.bf16.mxu0 0
    %181 = vmatpush1.bf16.msra.mxu0 0
    %182 = vmatprep.subr.bf16.mxu0 0
    %183 = vmatpush1.bf16.msra.mxu0 0
    %184 = vmatprep.subr.bf16.mxu0 0
    %185 = vmatpush1.bf16.msra.mxu0 0
    %186 = vmatprep.subr.bf16.mxu0 0
    %187 = vmatpush1.bf16.msra.mxu0 0
    %188 = vmatprep.subr.bf16.mxu0 0
    %189 = vmatpush1.bf16.msra.mxu0 0
    %190 = vmatprep.subr.bf16.mxu0 0
    %191 = vmatpush1.bf16.msra.mxu0 0
    %192 = vmatprep.subr.bf16.mxu0 0
    %193 = vmatpush1.bf16.msra.mxu0 0
    %194 = vmatprep.subr.bf16.mxu0 0
    %195 = vmatpush1.bf16.msra.mxu0 0
    %196 = vmatprep.subr.bf16.mxu0 0
    %197 = vmatpush1.bf16.msra.mxu0 0
    %198 = vmatprep.subr.bf16.mxu0 0
    %199 = vmatpush1.bf16.msra.mxu0 0
    %200 = vmatprep.subr.bf16.mxu0 0
    %201 = vmatpush1.bf16.msra.mxu0 0
    %202 = vmatprep.mubr.bf16.mxu0 0
    %203 = vmatmul.mubr.bf16.gmra.mrb[0].mxu0 %v168
    %v204 = vpop.f32.mrb[0].mxu0
    %v205 = vadd.f32 %v165, %v204
    %v206 = vpop.f32.mrb[0].mxu0
    %v207 = vpop.f32.mrb[0].mxu0
    %v208 = vadd.f32 %v165, %v207
    %v209 = vpop.f32.mrb[0].mxu0
    %210 = vdwg.mxu0
    %v211 = vmax.f32 %v205, 0.0
    %v212 = vmax.f32 %v208, 0.0
    %v213 = vpack.c.bf16 %v212, %v211
    %v214 = vld [vmem:[%s8] sm:$0xff]
    %v215 = vld [vmem:[%s8 + $0x8] sm:$0xff]
    %v216 = vld [vmem:[%s8 + $0x10] sm:$0xff]
    %v217 = vld [vmem:[%s8 + $0x18] sm:$0xff]
    %v218 = vld [vmem:[%s8 + $0x20] sm:$0xff]
    %v219 = vld [vmem:[%s8 + $0x28] sm:$0xff]
    %v220 = vld [vmem:[%s8 + $0x30] sm:$0xff]
    %v221 = vld [vmem:[%s8 + $0x38] sm:$0xff]
    %v222 = vpack.c.bf16 %v215, %v214
    %v223 = vpack.c.bf16 %v217, %v216
    %v224 = vpack.c.bf16 %v219, %v218
    %v225 = vpack.c.bf16 %v221, %v220
    %v226 = vld [vmem:[%s9] sm:$0x1]
    %v228 = vlaneseq
    %v229 = vshrl.u32 %v228, 7
    %v230 = vsub.s32 0, %v229
    %v231 = vrot.slane %v226, %v230
    %vm233 = vcmask 523264
    %v235 = vsel %vm233, %v213, 0
    %237 = vmatprep.subr.bf16.mxu0 0
    %238 = vmatpush1.bf16.msra.mxu0 %v222
    %239 = vmatprep.subr.bf16.mxu0 0
    %240 = vmatpush1.bf16.msra.mxu0 %v223
    %241 = vmatprep.subr.bf16.mxu0 0
    %242 = vmatpush1.bf16.msra.mxu0 %v224
    %243 = vmatprep.subr.bf16.mxu0 0
    %244 = vmatpush1.bf16.msra.mxu0 %v225
    %245 = vmatprep.subr.bf16.mxu0 0
    %246 = vmatpush1.bf16.msra.mxu0 0
    %247 = vmatprep.subr.bf16.mxu0 0
    %248 = vmatpush1.bf16.msra.mxu0 0
    %249 = vmatprep.subr.bf16.mxu0 0
    %250 = vmatpush1.bf16.msra.mxu0 0
    %251 = vmatprep.subr.bf16.mxu0 0
    %252 = vmatpush1.bf16.msra.mxu0 0
    %253 = vmatprep.subr.bf16.mxu0 0
    %254 = vmatpush1.bf16.msra.mxu0 0
    %255 = vmatprep.subr.bf16.mxu0 0
    %256 = vmatpush1.bf16.msra.mxu0 0
    %257 = vmatprep.subr.bf16.mxu0 0
    %258 = vmatpush1.bf16.msra.mxu0 0
    %259 = vmatprep.subr.bf16.mxu0 0
    %260 = vmatpush1.bf16.msra.mxu0 0
    %261 = vmatprep.subr.bf16.mxu0 0
    %262 = vmatpush1.bf16.msra.mxu0 0
    %263 = vmatprep.subr.bf16.mxu0 0
    %264 = vmatpush1.bf16.msra.mxu0 0
    %265 = vmatprep.subr.bf16.mxu0 0
    %266 = vmatpush1.bf16.msra.mxu0 0
    %267 = vmatprep.subr.bf16.mxu0 0
    %268 = vmatpush1.bf16.msra.mxu0 0
    %269 = vmatprep.mubr.bf16.mxu0 0
    %270 = vmatmul.mubr.bf16.gmra.mrb[0].mxu0 %v235
    %v271 = vpop.f32.mrb[0].mxu0
    %v272 = vadd.f32 %v231, %v271
    %v273 = vpop.f32.mrb[0].mxu0
    %v274 = vpop.f32.mrb[0].mxu0
    %v275 = vadd.f32 %v231, %v274
    %v276 = vpop.f32.mrb[0].mxu0
    %277 = vdwg.mxu0
    %v278 = vadd.f32 %v151, %v272
    %v279 = vadd.f32 %v152, %v275
    %v280 = vld [vmem:[%s10] sm:$0x1]
    %v281 = vld [vmem:[%s11] sm:$0x1]
    %v282 = vsel %vm59, %v278, 0.0
    %283 = vadd.xlane.f32.xlu0 %v282
    %v284 = vpop.xlane.xlu0 %283
    %v285 = vsel %vm59, %v279, 0.0
    %286 = vadd.xlane.f32.xlu0 %v285
    %v287 = vpop.xlane.xlu0 %286
    %v288 = vmul.f32 %v284, %v116
    %v289 = vmul.f32 %v287, %v116
    %v290 = vsub.f32 %v278, %v288
    %v291 = vsub.f32 %v279, %v289
    %v292 = vmul.f32 %v290, %v290
    %v293 = vmul.f32 %v291, %v291
    %v294 = vsel %vm59, %v292, 0.0
    %295 = vadd.xlane.f32.xlu0 %v294
    %v296 = vpop.xlane.xlu0 %295
    %v297 = vsel %vm59, %v293, 0.0
    %298 = vadd.xlane.f32.xlu0 %v297
    %v299 = vpop.xlane.xlu0 %298
    %v300 = vmul.f32 %v296, %v116
    %v301 = vmul.f32 %v299, %v116
    %v302 = vadd.f32 %v300, 1e-05
    %v303 = vadd.f32 %v301, 1e-05
    %v304 = vrsqrt.pop %v302
    %v305 = vrsqrt.pop %v303
    %v306 = vmul.f32 %v290, %v304
    %v307 = vmul.f32 %v291, %v305
    %v309 = vlaneseq
    %v310 = vshrl.u32 %v309, 7
    %v311 = vsub.s32 0, %v310
    %v312 = vrot.slane %v280, %v311
    %v314 = vmul.f32 %v306, %v312
    %v315 = vmul.f32 %v307, %v312
    %v317 = vlaneseq
    %v318 = vshrl.u32 %v317, 7
    %v319 = vsub.s32 0, %v318
    %v320 = vrot.slane %v281, %v319
    %v322 = vadd.f32 %v314, %v320
    %v323 = vadd.f32 %v315, %v320
    %324 = vst.msk [vmem:[#allocation2] sm:$0xff] %vm59, %v322
    %325 = vst.msk [vmem:[#allocation2 + $0x8] sm:$0xff] %vm59, %v323
    // Predicated region
    $region50: #{xey_transformer_layer.6} parent=1 // pred_check
      _
    $region51: #{xey_transformer_layer.6} parent=1 // pred_check_branch
      %327 = sbr.rel (0) target = $region53
    $region52: #{xey_transformer_layer.6} parent=1 // pred_region
      %s329 = ssub.s32 256, 256
      %330 = vsyncadd [#allocation3], %s329
      %s331 = sshll.u32 [#allocation2], 4
      %s332 = int_to_ptr.vmem [resolvable:$true] %s331
      %337 = dma.vmem_to_hbm [thread:$0]  %s332, 256, %s12, [#allocation3], 128, 128, 8
    $region53: #{xey_transformer_layer.6} parent=1 // pred_fallthru
      _
    // Predicated region
    $region54: #{xey_transformer_layer.6} parent=1 // pred_check
      _
    $region55: #{xey_transformer_layer.6} parent=1 // pred_check_branch
      %339 = sbr.rel (0) target = $region57
    $region56: #{xey_transformer_layer.6} parent=1 // pred_region
      %340 = dma.done [#allocation3], 256
    $region57: #{xey_transformer_layer.6} parent=1 // pred_fallthru
      _
    %341 = vsyncpa [#allocation3], 1

</llo_original>
